<compile_context>
chip_gen: v5e
topology: v5e:2x2
jax: 0.10.0
libtpu: 0.0.40
codegen_flags: <defaults>
</compile_context>

<pallas_src>
import functools

import jax
import jax.numpy as jnp
from jax.experimental import pallas as pl
from jax.experimental.pallas import tpu as pltpu

NUM_CLASSES = 5     # NUM_CLASSES is external in the reference script; fixed here.
K = 5               # Conv1d kernel size used by both conv layers.
B_TILE_MAX = 64     # batch elements per grid step (review: 64-128, v5e-safe)
NCP = 128           # classes padded to one lane-dense 128-wide output slab


def _round_up(n, m):
    return ((n + m - 1) // m) * m


def ecg_cnn_kernel(win_ref, w1_ref, b1_ref, w2_ref, b2_ref, w3_ref, b3_ref,
                   w4_ref, b4_ref, o_ref, *, l1p8, l2):
    # win : (6, nt)   conv1 windows, columns = (batch-major, pooled-pos minor):
    #                 win[j, b*l1p8 + p] = x[b, 2p + j] (zeros for p >= L1p)
    # w1  : (64, 6)   rows 0..31 = even-parity taps, rows 32..63 = odd-parity
    # b1  : (1, 32)   w2: (160, 64)  b2: (1, 64)  w3: (64, 64)  b3: (1, 64)
    # w4  : (64, 128) b4: (1, 128)   o: (b_tile, 128)
    b_tile = o_ref.shape[0]
    nt = win_ref.shape[1]                                    # b_tile * l1p8

    # ---- Conv1d(1->32, k=5), both max-pool parities, as one MXU matmul ------
    h_both = jnp.dot(w1_ref[...], win_ref[...],
                     preferred_element_type=jnp.float32)     # (64, nt)
    # ---- MaxPool1d(2): elementwise max of the two parity halves -------------
    m = jnp.maximum(h_both[:32, :], h_both[32:, :])          # (32, nt)
    hp = jnp.maximum(m.T + b1_ref[...], 0.0)                 # (nt, 32) + ReLU

    # ---- Conv1d(32->64, k=5) + ReLU as one im2col matmul (depth 160) --------
    hp_ext = jnp.concatenate(
        [hp, jnp.zeros((8, 32), jnp.float32)], axis=0)       # (nt + 8, 32)
    h_cols = jnp.concatenate(
        [hp_ext[k:k + nt, :] for k in range(K)], axis=1)     # (nt, 160)
    h2 = jnp.dot(h_cols, w2_ref[...],
                 preferred_element_type=jnp.float32) + b2_ref[...]
    h2 = jnp.maximum(h2, 0.0)                                # (nt, 64)

    # ---- AdaptiveAvgPool1d(1): per-batch mean over the l2 valid positions ---
    # (linear in b_tile; replaces the old quadratic masked-average S matmul)
    h2b = h2.reshape(b_tile, l1p8, 64)
    feat = jnp.sum(h2b[:, :l2, :], axis=1) * (1.0 / l2)      # (b_tile, 64)

    # ---- Linear(64,64) + ReLU ------------------------------------------------
    y = jnp.maximum(
        jnp.dot(feat, w3_ref[...],
                preferred_element_type=jnp.float32) + b3_ref[...], 0.0)

    # ---- Linear(64, NUM_CLASSES) + Sigmoid, lane-dense store ----------------
    z = jnp.dot(y, w4_ref[...],
                preferred_element_type=jnp.float32) + b4_ref[...]
    o_ref[...] = jax.nn.sigmoid(z)                           # (b_tile, 128)


def ecg_cnn_forward(x_ncl, w1, b1, w2, b2, w3, b3, w4, b4, *,
                    b_tile_max=B_TILE_MAX):
    """x_ncl: (B, 1, L) float32, weights in PyTorch layouts."""
    B, c_in, L = x_ncl.shape
    assert c_in == 1
    NC = w4.shape[0]
    L1 = L - (K - 1)            # conv1 valid length
    L1p = L1 // 2               # after MaxPool1d(2) (floor mode)
    L2 = L1p - (K - 1)          # conv2 valid length
    assert L2 >= 1, "input length too short for ECG_CNN"
    L1P8 = _round_up(L1p, 8)    # per-batch position padding (sublane aligned)

    b_tile = _round_up(min(b_tile_max, _round_up(B, 8)), 8)
    if (b_tile * L1P8) % 128:
        b_tile = _round_up(b_tile, 16)   # keep the win lane-block /128 aligned
    n_tiles = pl.cdiv(B, b_tile)
    B_pad = n_tiles * b_tile
    nt = b_tile * L1P8

    # ---- wrapper-side layout only (no model compute) -------------------------
    xs = jnp.pad(x_ncl[:, 0, :].astype(jnp.float32), ((0, B_pad - B), (0, 0)))
    # 6-sample stride-2 windows covering both max-pool parities of conv1:
    # win[j, b*L1P8 + p] = x[b, 2p + j]
    cols = [xs[:, j:j + 2 * L1p - 1:2] for j in range(K + 1)]  # (B_pad, L1p) each
    win = jnp.stack(cols, axis=0)                              # (6, B_pad, L1p)
    win = jnp.pad(win, ((0, 0), (0, 0), (0, L1P8 - L1p)))
    win = win.reshape(K + 1, B_pad * L1P8)                     # (6, B_pad*L1P8)

    w1sq = w1[:, 0, :].astype(jnp.float32)                     # (32, 5)
    w1both = jnp.zeros((64, K + 1), jnp.float32)
    w1both = w1both.at[:32, :K].set(w1sq)        # even parity: taps j = 0..4
    w1both = w1both.at[32:, 1:].set(w1sq)        # odd  parity: taps j = 1..5
    w2f = jnp.transpose(w2, (2, 1, 0)).reshape(K * 32, 64).astype(jnp.float32)
    w3t = jnp.transpose(w3, (1, 0)).astype(jnp.float32)        # (64, 64)
    w4p = jnp.pad(jnp.transpose(w4, (1, 0)).astype(jnp.float32),
                  ((0, 0), (0, NCP - NC)))                     # (64, 128)
    b1r = b1.reshape(1, -1).astype(jnp.float32)
    b2r = b2.reshape(1, -1).astype(jnp.float32)
    b3r = b3.reshape(1, -1).astype(jnp.float32)
    b4p = jnp.pad(b4.reshape(1, -1).astype(jnp.float32),
                  ((0, 0), (0, NCP - NC)))

    kernel = functools.partial(ecg_cnn_kernel, l1p8=L1P8, l2=L2)
    out = pl.pallas_call(
        kernel,
        out_shape=jax.ShapeDtypeStruct((B_pad, NCP), jnp.float32),
        grid=(n_tiles,),
        in_specs=[
            pl.BlockSpec((K + 1, nt), lambda i: (0, i)),       # conv1 windows
            pl.BlockSpec((64, K + 1), lambda i: (0, 0)),       # w1 (both parities)
            pl.BlockSpec((1, 32), lambda i: (0, 0)),           # b1
            pl.BlockSpec((K * 32, 64), lambda i: (0, 0)),      # w2 (flattened)
            pl.BlockSpec((1, 64), lambda i: (0, 0)),           # b2
            pl.BlockSpec((64, 64), lambda i: (0, 0)),          # w3
            pl.BlockSpec((1, 64), lambda i: (0, 0)),           # b3
            pl.BlockSpec((64, NCP), lambda i: (0, 0)),         # w4 (padded)
            pl.BlockSpec((1, NCP), lambda i: (0, 0)),          # b4 (padded)
        ],
        out_specs=pl.BlockSpec((b_tile, NCP), lambda i: (i, 0)),
        compiler_params=pltpu.CompilerParams(
            dimension_semantics=("parallel",),
            vmem_limit_bytes=48 * 1024 * 1024),
    )(win, w1both, b1r, w2f, b2r, w3t, b3r, w4p, b4p)

    return out[:B, :NC]                                        # (B, NC)


def reference_forward(x, w1, b1, w2, b2, w3, b3, w4, b4):
    """Pure-JAX mirror of the PyTorch forward (NCL layout), for verification."""
    B, _, L = x.shape
    L1 = L - (K - 1)
    h = jnp.zeros((B, 32, L1), jnp.float32)
    for k in range(K):
        h = h + w1[None, :, 0, k, None] * x[:, :, k:k + L1]
    h = jnp.maximum(h + b1[None, :, None], 0.0)
    L1p = L1 // 2
    h = jnp.max(h[:, :, :2 * L1p].reshape(B, 32, L1p, 2), axis=-1)
    L2 = L1p - (K - 1)
    h2 = jnp.zeros((B, 64, L2), jnp.float32)
    for k in range(K):
        h2 = h2 + jnp.einsum('oc,bct->bot', w2[:, :, k], h[:, :, k:k + L2])
    h2 = jnp.maximum(h2 + b2[None, :, None], 0.0)
    feat = jnp.mean(h2, axis=-1)                      # (B, 64)
    y = jnp.maximum(feat @ w3.T + b3, 0.0)
    return jax.nn.sigmoid(y @ w4.T + b4)


if __name__ == "__main__":
    B, L = 2, 64
    key = jax.random.PRNGKey(0)
    ks = jax.random.split(key, 9)
    x = jax.random.normal(ks[0], (B, 1, L), jnp.float32)
    w1 = 0.1 * jax.random.normal(ks[1], (32, 1, K), jnp.float32)
    b1 = 0.1 * jax.random.normal(ks[2], (32,), jnp.float32)
    w2 = 0.1 * jax.random.normal(ks[3], (64, 32, K), jnp.float32)
    b2 = 0.1 * jax.random.normal(ks[4], (64,), jnp.float32)
    w3 = 0.1 * jax.random.normal(ks[5], (64, 64), jnp.float32)
    b3 = 0.1 * jax.random.normal(ks[6], (64,), jnp.float32)
    w4 = 0.1 * jax.random.normal(ks[7], (NUM_CLASSES, 64), jnp.float32)
    b4 = 0.1 * jax.random.normal(ks[8], (NUM_CLASSES,), jnp.float32)

    out = ecg_cnn_forward(x, w1, b1, w2, b2, w3, b3, w4, b4)
    out = jax.block_until_ready(out)
    ref = reference_forward(x, w1, b1, w2, b2, w3, b3, w4, b4)

    assert out.shape == (B, NUM_CLASSES), out.shape
    if not bool(jnp.allclose(out, ref, atol=1e-4, rtol=1e-4)):
        raise AssertionError(f"mismatch vs reference:\n{out}\n{ref}")
    print("KERNEL_OK")
</pallas_src>

<mosaic_0001>
module attributes {stable_mosaic.version = 11 : i64} {
  func.func @ecg_cnn_kernel(%arg0: i32, %arg1: memref<6x256xf32, #tpu.memory_space<vmem>>, %arg2: memref<64x6xf32, #tpu.memory_space<vmem>>, %arg3: memref<1x32xf32, #tpu.memory_space<vmem>>, %arg4: memref<160x64xf32, #tpu.memory_space<vmem>>, %arg5: memref<1x64xf32, #tpu.memory_space<vmem>>, %arg6: memref<64x64xf32, #tpu.memory_space<vmem>>, %arg7: memref<1x64xf32, #tpu.memory_space<vmem>>, %arg8: memref<64x128xf32, #tpu.memory_space<vmem>>, %arg9: memref<1x128xf32, #tpu.memory_space<vmem>>, %arg10: memref<8x128xf32, #tpu.memory_space<vmem>>) attributes {dimension_semantics = [#tpu.dimension_semantics<parallel>], iteration_bounds = array<i64: 1>, scalar_prefetch = 0 : i64, scratch_operands = 0 : i64, tpu.core_type = #tpu.core_type<tc>, window_params = [{transform_indices = @transform_0, window_bounds = array<i64: 6, 256>}, {pipeline_mode = #tpu.pipeline_mode<synchronous>, transform_indices = @transform_1, window_bounds = array<i64: 64, 6>}, {pipeline_mode = #tpu.pipeline_mode<synchronous>, transform_indices = @transform_2, window_bounds = array<i64: 1, 32>}, {pipeline_mode = #tpu.pipeline_mode<synchronous>, transform_indices = @transform_3, window_bounds = array<i64: 160, 64>}, {pipeline_mode = #tpu.pipeline_mode<synchronous>, transform_indices = @transform_4, window_bounds = array<i64: 1, 64>}, {pipeline_mode = #tpu.pipeline_mode<synchronous>, transform_indices = @transform_5, window_bounds = array<i64: 64, 64>}, {pipeline_mode = #tpu.pipeline_mode<synchronous>, transform_indices = @transform_6, window_bounds = array<i64: 1, 64>}, {pipeline_mode = #tpu.pipeline_mode<synchronous>, transform_indices = @transform_7, window_bounds = array<i64: 64, 128>}, {pipeline_mode = #tpu.pipeline_mode<synchronous>, transform_indices = @transform_8, window_bounds = array<i64: 1, 128>}, {transform_indices = @transform_9, window_bounds = array<i64: 8, 128>}]} {
    %c0 = arith.constant 0 : index
    %c0_0 = arith.constant 0 : index
    %0 = vector.load %arg2[%c0, %c0_0] : memref<64x6xf32, #tpu.memory_space<vmem>>, vector<64x6xf32>
    %c0_1 = arith.constant 0 : index
    %c0_2 = arith.constant 0 : index
    %1 = vector.load %arg1[%c0_1, %c0_2] : memref<6x256xf32, #tpu.memory_space<vmem>>, vector<6x256xf32>
    %cst = arith.constant dense<0.000000e+00> : vector<64x256xf32>
    %2 = tpu.matmul %0, %1, %cst {dimension_numbers = #tpu.dot_dimension_numbers<[1], [0], [0], [1], [0, 0, 1, 1], [], []>} : vector<64x6xf32>, vector<6x256xf32>, vector<64x256xf32> -> vector<64x256xf32>
    %3 = vector.extract_strided_slice %2 {offsets = [0, 0], sizes = [32, 256], strides = [1, 1]} : vector<64x256xf32> to vector<32x256xf32>
    %4 = vector.extract_strided_slice %2 {offsets = [32, 0], sizes = [32, 256], strides = [1, 1]} : vector<64x256xf32> to vector<32x256xf32>
    %5 = arith.maximumf %3, %4 : vector<32x256xf32>
    %6 = tpu.transpose %5, [1, 0] : vector<32x256xf32> -> vector<256x32xf32>
    %c0_3 = arith.constant 0 : index
    %c0_4 = arith.constant 0 : index
    %7 = vector.load %arg3[%c0_3, %c0_4] : memref<1x32xf32, #tpu.memory_space<vmem>>, vector<1x32xf32>
    %8 = vector.broadcast %7 : vector<1x32xf32> to vector<256x32xf32>
    %9 = arith.addf %6, %8 : vector<256x32xf32>
    %cst_5 = arith.constant 0.000000e+00 : f32
    %10 = vector.broadcast %cst_5 : f32 to vector<256x32xf32>
    %11 = arith.maximumf %9, %10 : vector<256x32xf32>
    %cst_6 = arith.constant 0.000000e+00 : f32
    %12 = vector.broadcast %cst_6 : f32 to vector<8x32xf32>
    %13 = tpu.concatenate %11, %12 in 0 : vector<256x32xf32>, vector<8x32xf32> -> vector<264x32xf32>
    %14 = vector.extract_strided_slice %13 {offsets = [0, 0], sizes = [256, 32], strides = [1, 1]} : vector<264x32xf32> to vector<256x32xf32>
    %15 = vector.extract_strided_slice %13 {offsets = [1, 0], sizes = [256, 32], strides = [1, 1]} : vector<264x32xf32> to vector<256x32xf32>
    %16 = vector.extract_strided_slice %13 {offsets = [2, 0], sizes = [256, 32], strides = [1, 1]} : vector<264x32xf32> to vector<256x32xf32>
    %17 = vector.extract_strided_slice %13 {offsets = [3, 0], sizes = [256, 32], strides = [1, 1]} : vector<264x32xf32> to vector<256x32xf32>
    %18 = vector.extract_strided_slice %13 {offsets = [4, 0], sizes = [256, 32], strides = [1, 1]} : vector<264x32xf32> to vector<256x32xf32>
    %19 = tpu.concatenate %14, %15, %16, %17, %18 in 1 : vector<256x32xf32>, vector<256x32xf32>, vector<256x32xf32>, vector<256x32xf32>, vector<256x32xf32> -> vector<256x160xf32>
    %c0_7 = arith.constant 0 : index
    %c0_8 = arith.constant 0 : index
    %20 = vector.load %arg4[%c0_7, %c0_8] : memref<160x64xf32, #tpu.memory_space<vmem>>, vector<160x64xf32>
    %cst_9 = arith.constant dense<0.000000e+00> : vector<256x64xf32>
    %21 = tpu.matmul %19, %20, %cst_9 {dimension_numbers = #tpu.dot_dimension_numbers<[1], [0], [0], [1], [0, 0, 1, 1], [], []>} : vector<256x160xf32>, vector<160x64xf32>, vector<256x64xf32> -> vector<256x64xf32>
    %c0_10 = arith.constant 0 : index
    %c0_11 = arith.constant 0 : index
    %22 = vector.load %arg5[%c0_10, %c0_11] : memref<1x64xf32, #tpu.memory_space<vmem>>, vector<1x64xf32>
    %23 = vector.broadcast %22 : vector<1x64xf32> to vector<256x64xf32>
    %24 = arith.addf %21, %23 : vector<256x64xf32>
    %cst_12 = arith.constant 0.000000e+00 : f32
    %25 = vector.broadcast %cst_12 : f32 to vector<256x64xf32>
    %26 = arith.maximumf %24, %25 : vector<256x64xf32>
    %27 = vector.shape_cast %26 : vector<256x64xf32> to vector<8x32x64xf32>
    %28 = vector.extract_strided_slice %27 {offsets = [0, 0, 0], sizes = [8, 26, 64], strides = [1, 1, 1]} : vector<8x32x64xf32> to vector<8x26x64xf32>
    %cst_13 = arith.constant dense<0.000000e+00> : vector<8x64xf32>
    %29 = vector.multi_reduction <add>, %28, %cst_13 [1] : vector<8x26x64xf32> to vector<8x64xf32>
    %cst_14 = arith.constant 0.0384615399 : f32
    %30 = vector.broadcast %cst_14 : f32 to vector<8x64xf32>
    %31 = arith.mulf %29, %30 : vector<8x64xf32>
    %c0_15 = arith.constant 0 : index
    %c0_16 = arith.constant 0 : index
    %32 = vector.load %arg6[%c0_15, %c0_16] : memref<64x64xf32, #tpu.memory_space<vmem>>, vector<64x64xf32>
    %cst_17 = arith.constant dense<0.000000e+00> : vector<8x64xf32>
    %33 = tpu.matmul %31, %32, %cst_17 {dimension_numbers = #tpu.dot_dimension_numbers<[1], [0], [0], [1], [0, 0, 1, 1], [], []>} : vector<8x64xf32>, vector<64x64xf32>, vector<8x64xf32> -> vector<8x64xf32>
    %c0_18 = arith.constant 0 : index
    %c0_19 = arith.constant 0 : index
    %34 = vector.load %arg7[%c0_18, %c0_19] : memref<1x64xf32, #tpu.memory_space<vmem>>, vector<1x64xf32>
    %35 = vector.broadcast %34 : vector<1x64xf32> to vector<8x64xf32>
    %36 = arith.addf %33, %35 : vector<8x64xf32>
    %cst_20 = arith.constant 0.000000e+00 : f32
    %37 = vector.broadcast %cst_20 : f32 to vector<8x64xf32>
    %38 = arith.maximumf %36, %37 : vector<8x64xf32>
    %c0_21 = arith.constant 0 : index
    %c0_22 = arith.constant 0 : index
    %39 = vector.load %arg8[%c0_21, %c0_22] : memref<64x128xf32, #tpu.memory_space<vmem>>, vector<64x128xf32>
    %cst_23 = arith.constant dense<0.000000e+00> : vector<8x128xf32>
    %40 = tpu.matmul %38, %39, %cst_23 {dimension_numbers = #tpu.dot_dimension_numbers<[1], [0], [0], [1], [0, 0, 1, 1], [], []>} : vector<8x64xf32>, vector<64x128xf32>, vector<8x128xf32> -> vector<8x128xf32>
    %c0_24 = arith.constant 0 : index
    %c0_25 = arith.constant 0 : index
    %41 = vector.load %arg9[%c0_24, %c0_25] : memref<1x128xf32, #tpu.memory_space<vmem>>, vector<1x128xf32>
    %42 = vector.broadcast %41 : vector<1x128xf32> to vector<8x128xf32>
    %43 = arith.addf %40, %42 : vector<8x128xf32>
    %44 = arith.negf %43 : vector<8x128xf32>
    %45 = math.exp %44 : vector<8x128xf32>
    %cst_26 = arith.constant 1.000000e+00 : f32
    %46 = vector.broadcast %cst_26 : f32 to vector<8x128xf32>
    %47 = arith.addf %46, %45 : vector<8x128xf32>
    %48 = arith.divf %46, %47 : vector<8x128xf32>
    %c0_27 = arith.constant 0 : index
    %c0_28 = arith.constant 0 : index
    %49 = vector.load %arg10[%c0_27, %c0_28] : memref<8x128xf32, #tpu.memory_space<vmem>>, vector<8x128xf32>
    tpu.vector_store %arg10[%c0_27, %c0_28], %48 {strides = array<i32>} : memref<8x128xf32, #tpu.memory_space<vmem>>, vector<8x128xf32>,
    return
  }
  func.func @transform_0(%arg0: i32) -> (i32, i32) {
    %c0_i32 = arith.constant 0 : i32
    %c0_i32_0 = arith.constant 0 : i32
    return %c0_i32, %arg0 : i32, i32
  }
  func.func @transform_1(%arg0: i32) -> (i32, i32) {
    %c0_i32 = arith.constant 0 : i32
    %c0_i32_0 = arith.constant 0 : i32
    %c0_i32_1 = arith.constant 0 : i32
    return %c0_i32, %c0_i32_0 : i32, i32
  }
  func.func @transform_2(%arg0: i32) -> (i32, i32) {
    %c0_i32 = arith.constant 0 : i32
    %c0_i32_0 = arith.constant 0 : i32
    %c0_i32_1 = arith.constant 0 : i32
    return %c0_i32, %c0_i32_0 : i32, i32
  }
  func.func @transform_3(%arg0: i32) -> (i32, i32) {
    %c0_i32 = arith.constant 0 : i32
    %c0_i32_0 = arith.constant 0 : i32
    %c0_i32_1 = arith.constant 0 : i32
    return %c0_i32, %c0_i32_0 : i32, i32
  }
  func.func @transform_4(%arg0: i32) -> (i32, i32) {
    %c0_i32 = arith.constant 0 : i32
    %c0_i32_0 = arith.constant 0 : i32
    %c0_i32_1 = arith.constant 0 : i32
    return %c0_i32, %c0_i32_0 : i32, i32
  }
  func.func @transform_5(%arg0: i32) -> (i32, i32) {
    %c0_i32 = arith.constant 0 : i32
    %c0_i32_0 = arith.constant 0 : i32
    %c0_i32_1 = arith.constant 0 : i32
    return %c0_i32, %c0_i32_0 : i32, i32
  }
  func.func @transform_6(%arg0: i32) -> (i32, i32) {
    %c0_i32 = arith.constant 0 : i32
    %c0_i32_0 = arith.constant 0 : i32
    %c0_i32_1 = arith.constant 0 : i32
    return %c0_i32, %c0_i32_0 : i32, i32
  }
  func.func @transform_7(%arg0: i32) -> (i32, i32) {
    %c0_i32 = arith.constant 0 : i32
    %c0_i32_0 = arith.constant 0 : i32
    %c0_i32_1 = arith.constant 0 : i32
    return %c0_i32, %c0_i32_0 : i32, i32
  }
  func.func @transform_8(%arg0: i32) -> (i32, i32) {
    %c0_i32 = arith.constant 0 : i32
    %c0_i32_0 = arith.constant 0 : i32
    %c0_i32_1 = arith.constant 0 : i32
    return %c0_i32, %c0_i32_0 : i32, i32
  }
  func.func @transform_9(%arg0: i32) -> (i32, i32) {
    %c0_i32 = arith.constant 0 : i32
    %c0_i32_0 = arith.constant 0 : i32
    return %arg0, %c0_i32 : i32, i32
  }
}

</mosaic_0001>

<llo_original>
// kernel: tpu_custom_call.1
$region0: #{tpu_custom_call.1}
  #allocation0 [shape = 'u32[]', space=smem, size = 0x4, offset = 0x4, fixed_abs, tag = 'smem constant byte address 0x4 - core index']
  #allocation1 [shape = 'u32[72,128]{1,0:T(1,128)}', space=vmem, size = 0x9000, scoped, tag = 'internal scratch']
  %s0 = inlined_call_operand.vmem [shape: f32[6,256], index: 0, kind: input, shape index: {}]
  %s1 = inlined_call_operand.vmem [shape: f32[64,6], index: 1, kind: input, shape index: {}]
  %s2 = inlined_call_operand.vmem [shape: f32[1,32], index: 2, kind: input, shape index: {}]
  %s3 = inlined_call_operand.vmem [shape: f32[160,64], index: 3, kind: input, shape index: {}]
  %s4 = inlined_call_operand.vmem [shape: f32[1,64], index: 4, kind: input, shape index: {}]
  %s5 = inlined_call_operand.vmem [shape: f32[64,64], index: 5, kind: input, shape index: {}]
  %s6 = inlined_call_operand.vmem [shape: f32[1,64], index: 6, kind: input, shape index: {}]
  %s7 = inlined_call_operand.vmem [shape: f32[64,128], index: 7, kind: input, shape index: {}]
  %s8 = inlined_call_operand.vmem [shape: f32[1,128], index: 8, kind: input, shape index: {}]
  %s9 = inlined_call_operand.hbm [shape: f32[8,128], index: 9, kind: output, shape index: {}]
  %s10 = sld [smem:[#allocation0]]
  $region46: #{tpu_custom_call.1} parent=0
    _
  %s12 = ssub.s32 1, %s10
  %s13 = scalar_select 0, %s12, %s10
  $region1: #{tpu_custom_call.1} parent=0
    #allocation2 [shape = 'u8[4096]{0}', space=vmem, size = 0x1000, scoped, tag = 'output window, operand 0, single buffered']
    #allocation3 [shape = 's32[1]{0}', space=sflag, size = 0x4, scoped, tag = 'scoped memory for tpu_custom_call.1']
    %14 = vsyncpa [#allocation3], 0
    // Predicated region
    $region2: #{tpu_custom_call.1} parent=1 // pred_check
      _
    $region3: #{tpu_custom_call.1} parent=1 // pred_check_branch
      %16 = sbr.rel (0) target = $region5
    $region4: #{tpu_custom_call.1} parent=1 // pred_region
      _
    $region5: #{tpu_custom_call.1} parent=1 // pred_fallthru
      _
    // Predicated region
    $region6: #{tpu_custom_call.1} parent=1 // pred_check
      _
    $region7: #{tpu_custom_call.1} parent=1 // pred_check_branch
      %18 = sbr.rel (0) target = $region9
    $region8: #{tpu_custom_call.1} parent=1 // pred_region
      _
    $region9: #{tpu_custom_call.1} parent=1 // pred_fallthru
      _
    // Predicated region
    $region10: #{tpu_custom_call.1} parent=1 // pred_check
      _
    $region11: #{tpu_custom_call.1} parent=1 // pred_check_branch
      %20 = sbr.rel (0) target = $region13
    $region12: #{tpu_custom_call.1} parent=1 // pred_region
      _
    $region13: #{tpu_custom_call.1} parent=1 // pred_fallthru
      _
    // Predicated region
    $region14: #{tpu_custom_call.1} parent=1 // pred_check
      _
    $region15: #{tpu_custom_call.1} parent=1 // pred_check_branch
      %22 = sbr.rel (0) target = $region17
    $region16: #{tpu_custom_call.1} parent=1 // pred_region
      _
    $region17: #{tpu_custom_call.1} parent=1 // pred_fallthru
      _
    // Predicated region
    $region18: #{tpu_custom_call.1} parent=1 // pred_check
      _
    $region19: #{tpu_custom_call.1} parent=1 // pred_check_branch
      %24 = sbr.rel (0) target = $region21
    $region20: #{tpu_custom_call.1} parent=1 // pred_region
      _
    $region21: #{tpu_custom_call.1} parent=1 // pred_fallthru
      _
    // Predicated region
    $region22: #{tpu_custom_call.1} parent=1 // pred_check
      _
    $region23: #{tpu_custom_call.1} parent=1 // pred_check_branch
      %26 = sbr.rel (0) target = $region25
    $region24: #{tpu_custom_call.1} parent=1 // pred_region
      _
    $region25: #{tpu_custom_call.1} parent=1 // pred_fallthru
      _
    // Predicated region
    $region26: #{tpu_custom_call.1} parent=1 // pred_check
      _
    $region27: #{tpu_custom_call.1} parent=1 // pred_check_branch
      %28 = sbr.rel (0) target = $region29
    $region28: #{tpu_custom_call.1} parent=1 // pred_region
      _
    $region29: #{tpu_custom_call.1} parent=1 // pred_fallthru
      _
    // Predicated region
    $region30: #{tpu_custom_call.1} parent=1 // pred_check
      _
    $region31: #{tpu_custom_call.1} parent=1 // pred_check_branch
      %30 = sbr.rel (0) target = $region33
    $region32: #{tpu_custom_call.1} parent=1 // pred_region
      _
    $region33: #{tpu_custom_call.1} parent=1 // pred_fallthru
      _
    // Predicated region
    $region34: #{tpu_custom_call.1} parent=1 // pred_check
      _
    $region35: #{tpu_custom_call.1} parent=1 // pred_check_branch
      %32 = sbr.rel (0) target = $region37
    $region36: #{tpu_custom_call.1} parent=1 // pred_region
      _
    $region37: #{tpu_custom_call.1} parent=1 // pred_fallthru
      _
    %v33 = vld [vmem:[%s1] sm:$0xff]
    %v34 = vld [vmem:[%s1 + $0x8] sm:$0xff]
    %v35 = vld [vmem:[%s1 + $0x10] sm:$0xff]
    %v36 = vld [vmem:[%s1 + $0x18] sm:$0xff]
    %v37 = vld [vmem:[%s1 + $0x20] sm:$0xff]
    %v38 = vld [vmem:[%s1 + $0x28] sm:$0xff]
    %v39 = vld [vmem:[%s1 + $0x30] sm:$0xff]
    %v40 = vld [vmem:[%s1 + $0x38] sm:$0xff]
    %v41 = vld [vmem:[%s0] sm:$0x3f]
    %v42 = vld [vmem:[%s0 + $0x8] sm:$0x3f]
    %vm43 = vcmask 48128
    %v45 = vsel %vm43, %v33, 0
    %v48 = vsel %vm43, %v34, 0
    %v51 = vsel %vm43, %v35, 0
    %v54 = vsel %vm43, %v36, 0
    %v57 = vsel %vm43, %v37, 0
    %v60 = vsel %vm43, %v38, 0
    %v63 = vsel %vm43, %v39, 0
    %v66 = vsel %vm43, %v40, 0
    %vm68 = vcmask 1045504
    %v70 = vsel %vm68, %v41, 0
    %v73 = vsel %vm68, %v42, 0
    %75 = vmatpush.msra.mxu0 0.0
    %76 = vmatpush.msra.mxu0 0.0
    %77 = vmatpush.msra.mxu0 0.0
    %78 = vmatpush.msra.mxu0 0.0
    %79 = vmatpush.msra.mxu0 0.0
    %80 = vmatpush.msra.mxu0 0.0
    %81 = vmatpush.msra.mxu0 0.0
    %82 = vmatpush.msra.mxu0 0.0
    %83 = vmatpush.msra.mxu0 0.0
    %84 = vmatpush.msra.mxu0 0.0
    %85 = vmatpush.msra.mxu0 0.0
    %86 = vmatpush.msra.mxu0 0.0
    %87 = vmatpush.msra.mxu0 0.0
    %88 = vmatpush.msra.mxu0 0.0
    %89 = vmatpush.msra.mxu0 0.0
    %90 = vmatpush.msra.mxu0 %v70
    %91 = vmatmul.f32.gmra.mxu0 %v45
    %v92 = vpop.f32.mrf.mxu0
    %v93 = vadd.f32 0.0, %v92
    %94 = vmatmul.f32.gmra.mxu0 %v48
    %v95 = vpop.f32.mrf.mxu0
    %v96 = vadd.f32 0.0, %v95
    %97 = vmatmul.f32.gmra.mxu0 %v51
    %v98 = vpop.f32.mrf.mxu0
    %v99 = vadd.f32 0.0, %v98
    %100 = vmatmul.f32.gmra.mxu0 %v54
    %v101 = vpop.f32.mrf.mxu0
    %v102 = vadd.f32 0.0, %v101
    %103 = vmatmul.f32.gmra.mxu0 %v57
    %v104 = vpop.f32.mrf.mxu0
    %v105 = vadd.f32 0.0, %v104
    %106 = vmatmul.f32.gmra.mxu0 %v60
    %v107 = vpop.f32.mrf.mxu0
    %v108 = vadd.f32 0.0, %v107
    %109 = vmatmul.f32.gmra.mxu0 %v63
    %v110 = vpop.f32.mrf.mxu0
    %v111 = vadd.f32 0.0, %v110
    %112 = vmatmul.f32.gmra.mxu0 %v66
    %v113 = vpop.f32.mrf.mxu0
    %v114 = vadd.f32 0.0, %v113
    %115 = vdwg.mxu0
    %116 = vmatpush.msra.mxu0 0.0
    %117 = vmatpush.msra.mxu0 0.0
    %118 = vmatpush.msra.mxu0 0.0
    %119 = vmatpush.msra.mxu0 0.0
    %120 = vmatpush.msra.mxu0 0.0
    %121 = vmatpush.msra.mxu0 0.0
    %122 = vmatpush.msra.mxu0 0.0
    %123 = vmatpush.msra.mxu0 0.0
    %124 = vmatpush.msra.mxu0 0.0
    %125 = vmatpush.msra.mxu0 0.0
    %126 = vmatpush.msra.mxu0 0.0
    %127 = vmatpush.msra.mxu0 0.0
    %128 = vmatpush.msra.mxu0 0.0
    %129 = vmatpush.msra.mxu0 0.0
    %130 = vmatpush.msra.mxu0 0.0
    %131 = vmatpush.msra.mxu0 %v73
    %132 = vmatmul.f32.gmra.mxu0 %v45
    %v133 = vpop.f32.mrf.mxu0
    %v134 = vadd.f32 0.0, %v133
    %135 = vmatmul.f32.gmra.mxu0 %v48
    %v136 = vpop.f32.mrf.mxu0
    %v137 = vadd.f32 0.0, %v136
    %138 = vmatmul.f32.gmra.mxu0 %v51
    %v139 = vpop.f32.mrf.mxu0
    %v140 = vadd.f32 0.0, %v139
    %141 = vmatmul.f32.gmra.mxu0 %v54
    %v142 = vpop.f32.mrf.mxu0
    %v143 = vadd.f32 0.0, %v142
    %144 = vmatmul.f32.gmra.mxu0 %v57
    %v145 = vpop.f32.mrf.mxu0
    %v146 = vadd.f32 0.0, %v145
    %147 = vmatmul.f32.gmra.mxu0 %v60
    %v148 = vpop.f32.mrf.mxu0
    %v149 = vadd.f32 0.0, %v148
    %150 = vmatmul.f32.gmra.mxu0 %v63
    %v151 = vpop.f32.mrf.mxu0
    %v152 = vadd.f32 0.0, %v151
    %153 = vmatmul.f32.gmra.mxu0 %v66
    %v154 = vpop.f32.mrf.mxu0
    %v155 = vadd.f32 0.0, %v154
    %156 = vdwg.mxu0
    %v157 = vmax.f32 %v93, %v105
    %v158 = vmax.f32 %v134, %v146
    %v159 = vmax.f32 %v96, %v108
    %v160 = vmax.f32 %v137, %v149
    %v161 = vmax.f32 %v99, %v111
    %v162 = vmax.f32 %v140, %v152
    %v163 = vmax.f32 %v102, %v114
    %v164 = vmax.f32 %v143, %v155
    %165 = vxpose.xlu0.b32.start [1/16] %v157, 128
    %166 = vxpose.xlu0.b32.cont [2/16] %v159, 128
    %167 = vxpose.xlu0.b32.cont [3/16] %v161, 128
    %168 = vxpose.xlu0.b32.cont [4/16] %v163, 128
    %169 = vxpose.xlu0.b32.cont [5/16] 0.0, 128
    %170 = vxpose.xlu0.b32.cont [6/16] 0.0, 128
    %171 = vxpose.xlu0.b32.cont [7/16] 0.0, 128
    %172 = vxpose.xlu0.b32.cont [8/16] 0.0, 128
    %173 = vxpose.xlu0.b32.cont [9/16] 0.0, 128
    %174 = vxpose.xlu0.b32.cont [10/16] 0.0, 128
    %175 = vxpose.xlu0.b32.cont [11/16] 0.0, 128
    %176 = vxpose.xlu0.b32.cont [12/16] 0.0, 128
    %177 = vxpose.xlu0.b32.cont [13/16] 0.0, 128
    %178 = vxpose.xlu0.b32.cont [14/16] 0.0, 128
    %179 = vxpose.xlu0.b32.cont [15/16] 0.0, 128
    %180 = vxpose.xlu0.b32.end [16/16] 0.0, 128
    %v181 = vpop.trf.xlu0
    %v182 = vpop.trf.xlu0
    %v183 = vpop.trf.xlu0
    %v184 = vpop.trf.xlu0
    %v185 = vpop.trf.xlu0
    %v186 = vpop.trf.xlu0
    %v187 = vpop.trf.xlu0
    %v188 = vpop.trf.xlu0
    %v189 = vpop.trf.xlu0
    %v190 = vpop.trf.xlu0
    %v191 = vpop.trf.xlu0
    %v192 = vpop.trf.xlu0
    %v193 = vpop.trf.xlu0
    %v194 = vpop.trf.xlu0
    %v195 = vpop.trf.xlu0
    %v196 = vpop.trf.xlu0
    %197 = vxpose.xlu0.b32.start [1/16] %v158, 128
    %198 = vxpose.xlu0.b32.cont [2/16] %v160, 128
    %199 = vxpose.xlu0.b32.cont [3/16] %v162, 128
    %200 = vxpose.xlu0.b32.cont [4/16] %v164, 128
    %201 = vxpose.xlu0.b32.cont [5/16] 0.0, 128
    %202 = vxpose.xlu0.b32.cont [6/16] 0.0, 128
    %203 = vxpose.xlu0.b32.cont [7/16] 0.0, 128
    %204 = vxpose.xlu0.b32.cont [8/16] 0.0, 128
    %205 = vxpose.xlu0.b32.cont [9/16] 0.0, 128
    %206 = vxpose.xlu0.b32.cont [10/16] 0.0, 128
    %207 = vxpose.xlu0.b32.cont [11/16] 0.0, 128
    %208 = vxpose.xlu0.b32.cont [12/16] 0.0, 128
    %209 = vxpose.xlu0.b32.cont [13/16] 0.0, 128
    %210 = vxpose.xlu0.b32.cont [14/16] 0.0, 128
    %211 = vxpose.xlu0.b32.cont [15/16] 0.0, 128
    %212 = vxpose.xlu0.b32.end [16/16] 0.0, 128
    %v213 = vpop.trf.xlu0
    %v214 = vpop.trf.xlu0
    %v215 = vpop.trf.xlu0
    %v216 = vpop.trf.xlu0
    %v217 = vpop.trf.xlu0
    %v218 = vpop.trf.xlu0
    %v219 = vpop.trf.xlu0
    %v220 = vpop.trf.xlu0
    %v221 = vpop.trf.xlu0
    %v222 = vpop.trf.xlu0
    %v223 = vpop.trf.xlu0
    %v224 = vpop.trf.xlu0
    %v225 = vpop.trf.xlu0
    %v226 = vpop.trf.xlu0
    %v227 = vpop.trf.xlu0
    %v228 = vpop.trf.xlu0
    %v229 = vld [vmem:[%s2] sm:$0x1]
    %v231 = vperm.slane %v229, 0
    %v233 = vadd.f32 %v181, %v231
    %v234 = vadd.f32 %v182, %v231
    %v235 = vadd.f32 %v183, %v231
    %v236 = vadd.f32 %v184, %v231
    %v237 = vadd.f32 %v185, %v231
    %v238 = vadd.f32 %v186, %v231
    %v239 = vadd.f32 %v187, %v231
    %v240 = vadd.f32 %v188, %v231
    %v241 = vadd.f32 %v189, %v231
    %v242 = vadd.f32 %v190, %v231
    %v243 = vadd.f32 %v191, %v231
    %v244 = vadd.f32 %v192, %v231
    %v245 = vadd.f32 %v193, %v231
    %v246 = vadd.f32 %v194, %v231
    %v247 = vadd.f32 %v195, %v231
    %v248 = vadd.f32 %v196, %v231
    %v249 = vadd.f32 %v213, %v231
    %v250 = vadd.f32 %v214, %v231
    %v251 = vadd.f32 %v215, %v231
    %v252 = vadd.f32 %v216, %v231
    %v253 = vadd.f32 %v217, %v231
    %v254 = vadd.f32 %v218, %v231
    %v255 = vadd.f32 %v219, %v231
    %v256 = vadd.f32 %v220, %v231
    %v257 = vadd.f32 %v221, %v231
    %v258 = vadd.f32 %v222, %v231
    %v259 = vadd.f32 %v223, %v231
    %v260 = vadd.f32 %v224, %v231
    %v261 = vadd.f32 %v225, %v231
    %v262 = vadd.f32 %v226, %v231
    %v263 = vadd.f32 %v227, %v231
    %v264 = vadd.f32 %v228, %v231
    %v265 = vmax.f32 %v233, 0.0
    %v266 = vmax.f32 %v234, 0.0
    %v267 = vmax.f32 %v235, 0.0
    %v268 = vmax.f32 %v236, 0.0
    %v269 = vmax.f32 %v237, 0.0
    %v270 = vmax.f32 %v238, 0.0
    %v271 = vmax.f32 %v239, 0.0
    %v272 = vmax.f32 %v240, 0.0
    %v273 = vmax.f32 %v241, 0.0
    %v274 = vmax.f32 %v242, 0.0
    %v275 = vmax.f32 %v243, 0.0
    %v276 = vmax.f32 %v244, 0.0
    %v277 = vmax.f32 %v245, 0.0
    %v278 = vmax.f32 %v246, 0.0
    %v279 = vmax.f32 %v247, 0.0
    %v280 = vmax.f32 %v248, 0.0
    %v281 = vmax.f32 %v249, 0.0
    %v282 = vmax.f32 %v250, 0.0
    %v283 = vmax.f32 %v251, 0.0
    %v284 = vmax.f32 %v252, 0.0
    %v285 = vmax.f32 %v253, 0.0
    %v286 = vmax.f32 %v254, 0.0
    %v287 = vmax.f32 %v255, 0.0
    %v288 = vmax.f32 %v256, 0.0
    %v289 = vmax.f32 %v257, 0.0
    %v290 = vmax.f32 %v258, 0.0
    %v291 = vmax.f32 %v259, 0.0
    %v292 = vmax.f32 %v260, 0.0
    %v293 = vmax.f32 %v261, 0.0
    %v294 = vmax.f32 %v262, 0.0
    %v295 = vmax.f32 %v263, 0.0
    %v296 = vmax.f32 %v264, 0.0
    %vm330 = vcmask 1046528
    %v331 = vrot.slane %v265, 1
    %v332 = vrot.slane %v266, 1
    %v333 = vsel %vm330, %v331, %v332
    %v334 = vrot.slane %v267, 1
    %v335 = vsel %vm330, %v332, %v334
    %v336 = vrot.slane %v268, 1
    %v337 = vsel %vm330, %v334, %v336
    %v338 = vrot.slane %v269, 1
    %v339 = vsel %vm330, %v336, %v338
    %v340 = vrot.slane %v270, 1
    %v341 = vsel %vm330, %v338, %v340
    %v342 = vrot.slane %v271, 1
    %v343 = vsel %vm330, %v340, %v342
    %v344 = vrot.slane %v272, 1
    %v345 = vsel %vm330, %v342, %v344
    %v346 = vrot.slane %v273, 1
    %v347 = vsel %vm330, %v344, %v346
    %v348 = vrot.slane %v274, 1
    %v349 = vsel %vm330, %v346, %v348
    %v350 = vrot.slane %v275, 1
    %v351 = vsel %vm330, %v348, %v350
    %v352 = vrot.slane %v276, 1
    %v353 = vsel %vm330, %v350, %v352
    %v354 = vrot.slane %v277, 1
    %v355 = vsel %vm330, %v352, %v354
    %v356 = vrot.slane %v278, 1
    %v357 = vsel %vm330, %v354, %v356
    %v358 = vrot.slane %v279, 1
    %v359 = vsel %vm330, %v356, %v358
    %v360 = vrot.slane %v280, 1
    %v361 = vsel %vm330, %v358, %v360
    %v362 = vrot.slane %v281, 1
    %v363 = vsel %vm330, %v360, %v362
    %v364 = vrot.slane %v282, 1
    %v365 = vsel %vm330, %v362, %v364
    %v366 = vrot.slane %v283, 1
    %v367 = vsel %vm330, %v364, %v366
    %v368 = vrot.slane %v284, 1
    %v369 = vsel %vm330, %v366, %v368
    %v370 = vrot.slane %v285, 1
    %v371 = vsel %vm330, %v368, %v370
    %v372 = vrot.slane %v286, 1
    %v373 = vsel %vm330, %v370, %v372
    %v374 = vrot.slane %v287, 1
    %v375 = vsel %vm330, %v372, %v374
    %v376 = vrot.slane %v288, 1
    %v377 = vsel %vm330, %v374, %v376
    %v378 = vrot.slane %v289, 1
    %v379 = vsel %vm330, %v376, %v378
    %v380 = vrot.slane %v290, 1
    %v381 = vsel %vm330, %v378, %v380
    %v382 = vrot.slane %v291, 1
    %v383 = vsel %vm330, %v380, %v382
    %v384 = vrot.slane %v292, 1
    %v385 = vsel %vm330, %v382, %v384
    %v386 = vrot.slane %v293, 1
    %v387 = vsel %vm330, %v384, %v386
    %v388 = vrot.slane %v294, 1
    %v389 = vsel %vm330, %v386, %v388
    %v390 = vrot.slane %v295, 1
    %v391 = vsel %vm330, %v388, %v390
    %v392 = vrot.slane %v296, 1
    %v393 = vsel %vm330, %v390, %v392
    %v394 = vrot.slane 0.0, 1
    %v395 = vsel %vm330, %v392, %v394
    %396 = vrot.lane.b32.xlu0 %v333, 32
    %v397 = vpop.permute.xlu0 %396
    %398 = vrot.lane.b32.xlu0 %v335, 32
    %v399 = vpop.permute.xlu0 %398
    %400 = vrot.lane.b32.xlu0 %v337, 32
    %v401 = vpop.permute.xlu0 %400
    %402 = vrot.lane.b32.xlu0 %v339, 32
    %v403 = vpop.permute.xlu0 %402
    %404 = vrot.lane.b32.xlu0 %v341, 32
    %v405 = vpop.permute.xlu0 %404
    %406 = vrot.lane.b32.xlu0 %v343, 32
    %v407 = vpop.permute.xlu0 %406
    %408 = vrot.lane.b32.xlu0 %v345, 32
    %v409 = vpop.permute.xlu0 %408
    %410 = vrot.lane.b32.xlu0 %v347, 32
    %v411 = vpop.permute.xlu0 %410
    %412 = vrot.lane.b32.xlu0 %v349, 32
    %v413 = vpop.permute.xlu0 %412
    %414 = vrot.lane.b32.xlu0 %v351, 32
    %v415 = vpop.permute.xlu0 %414
    %416 = vrot.lane.b32.xlu0 %v353, 32
    %v417 = vpop.permute.xlu0 %416
    %418 = vrot.lane.b32.xlu0 %v355, 32
    %v419 = vpop.permute.xlu0 %418
    %420 = vrot.lane.b32.xlu0 %v357, 32
    %v421 = vpop.permute.xlu0 %420
    %422 = vrot.lane.b32.xlu0 %v359, 32
    %v423 = vpop.permute.xlu0 %422
    %424 = vrot.lane.b32.xlu0 %v361, 32
    %v425 = vpop.permute.xlu0 %424
    %426 = vrot.lane.b32.xlu0 %v363, 32
    %v427 = vpop.permute.xlu0 %426
    %428 = vrot.lane.b32.xlu0 %v365, 32
    %v429 = vpop.permute.xlu0 %428
    %430 = vrot.lane.b32.xlu0 %v367, 32
    %v431 = vpop.permute.xlu0 %430
    %432 = vrot.lane.b32.xlu0 %v369, 32
    %v433 = vpop.permute.xlu0 %432
    %434 = vrot.lane.b32.xlu0 %v371, 32
    %v435 = vpop.permute.xlu0 %434
    %436 = vrot.lane.b32.xlu0 %v373, 32
    %v437 = vpop.permute.xlu0 %436
    %438 = vrot.lane.b32.xlu0 %v375, 32
    %v439 = vpop.permute.xlu0 %438
    %440 = vrot.lane.b32.xlu0 %v377, 32
    %v441 = vpop.permute.xlu0 %440
    %442 = vrot.lane.b32.xlu0 %v379, 32
    %v443 = vpop.permute.xlu0 %442
    %444 = vrot.lane.b32.xlu0 %v381, 32
    %v445 = vpop.permute.xlu0 %444
    %446 = vrot.lane.b32.xlu0 %v383, 32
    %v447 = vpop.permute.xlu0 %446
    %448 = vrot.lane.b32.xlu0 %v385, 32
    %v449 = vpop.permute.xlu0 %448
    %450 = vrot.lane.b32.xlu0 %v387, 32
    %v451 = vpop.permute.xlu0 %450
    %452 = vrot.lane.b32.xlu0 %v389, 32
    %v453 = vpop.permute.xlu0 %452
    %454 = vrot.lane.b32.xlu0 %v391, 32
    %v455 = vpop.permute.xlu0 %454
    %456 = vrot.lane.b32.xlu0 %v393, 32
    %v457 = vpop.permute.xlu0 %456
    %458 = vrot.lane.b32.xlu0 %v395, 32
    %v459 = vpop.permute.xlu0 %458
    %v492 = vrot.slane %v265, 2
    %v493 = vrot.slane %v266, 2
    %v494 = vsel %vm68, %v492, %v493
    %v495 = vrot.slane %v267, 2
    %v496 = vsel %vm68, %v493, %v495
    %v497 = vrot.slane %v268, 2
    %v498 = vsel %vm68, %v495, %v497
    %v499 = vrot.slane %v269, 2
    %v500 = vsel %vm68, %v497, %v499
    %v501 = vrot.slane %v270, 2
    %v502 = vsel %vm68, %v499, %v501
    %v503 = vrot.slane %v271, 2
    %v504 = vsel %vm68, %v501, %v503
    %v505 = vrot.slane %v272, 2
    %v506 = vsel %vm68, %v503, %v505
    %v507 = vrot.slane %v273, 2
    %v508 = vsel %vm68, %v505, %v507
    %v509 = vrot.slane %v274, 2
    %v510 = vsel %vm68, %v507, %v509
    %v511 = vrot.slane %v275, 2
    %v512 = vsel %vm68, %v509, %v511
    %v513 = vrot.slane %v276, 2
    %v514 = vsel %vm68, %v511, %v513
    %v515 = vrot.slane %v277, 2
    %v516 = vsel %vm68, %v513, %v515
    %v517 = vrot.slane %v278, 2
    %v518 = vsel %vm68, %v515, %v517
    %v519 = vrot.slane %v279, 2
    %v520 = vsel %vm68, %v517, %v519
    %v521 = vrot.slane %v280, 2
    %v522 = vsel %vm68, %v519, %v521
    %v523 = vrot.slane %v281, 2
    %v524 = vsel %vm68, %v521, %v523
    %v525 = vrot.slane %v282, 2
    %v526 = vsel %vm68, %v523, %v525
    %v527 = vrot.slane %v283, 2
    %v528 = vsel %vm68, %v525, %v527
    %v529 = vrot.slane %v284, 2
    %v530 = vsel %vm68, %v527, %v529
    %v531 = vrot.slane %v285, 2
    %v532 = vsel %vm68, %v529, %v531
    %v533 = vrot.slane %v286, 2
    %v534 = vsel %vm68, %v531, %v533
    %v535 = vrot.slane %v287, 2
    %v536 = vsel %vm68, %v533, %v535
    %v537 = vrot.slane %v288, 2
    %v538 = vsel %vm68, %v535, %v537
    %v539 = vrot.slane %v289, 2
    %v540 = vsel %vm68, %v537, %v539
    %v541 = vrot.slane %v290, 2
    %v542 = vsel %vm68, %v539, %v541
    %v543 = vrot.slane %v291, 2
    %v544 = vsel %vm68, %v541, %v543
    %v545 = vrot.slane %v292, 2
    %v546 = vsel %vm68, %v543, %v545
    %v547 = vrot.slane %v293, 2
    %v548 = vsel %vm68, %v545, %v547
    %v549 = vrot.slane %v294, 2
    %v550 = vsel %vm68, %v547, %v549
    %v551 = vrot.slane %v295, 2
    %v552 = vsel %vm68, %v549, %v551
    %v553 = vrot.slane %v296, 2
    %v554 = vsel %vm68, %v551, %v553
    %v555 = vrot.slane 0.0, 2
    %v556 = vsel %vm68, %v553, %v555
    %557 = vrot.lane.b32.xlu0 %v494, 64
    %v558 = vpop.permute.xlu0 %557
    %559 = vrot.lane.b32.xlu0 %v496, 64
    %v560 = vpop.permute.xlu0 %559
    %561 = vrot.lane.b32.xlu0 %v498, 64
    %v562 = vpop.permute.xlu0 %561
    %563 = vrot.lane.b32.xlu0 %v500, 64
    %v564 = vpop.permute.xlu0 %563
    %565 = vrot.lane.b32.xlu0 %v502, 64
    %v566 = vpop.permute.xlu0 %565
    %567 = vrot.lane.b32.xlu0 %v504, 64
    %v568 = vpop.permute.xlu0 %567
    %569 = vrot.lane.b32.xlu0 %v506, 64
    %v570 = vpop.permute.xlu0 %569
    %571 = vrot.lane.b32.xlu0 %v508, 64
    %v572 = vpop.permute.xlu0 %571
    %573 = vrot.lane.b32.xlu0 %v510, 64
    %v574 = vpop.permute.xlu0 %573
    %575 = vrot.lane.b32.xlu0 %v512, 64
    %v576 = vpop.permute.xlu0 %575
    %577 = vrot.lane.b32.xlu0 %v514, 64
    %v578 = vpop.permute.xlu0 %577
    %579 = vrot.lane.b32.xlu0 %v516, 64
    %v580 = vpop.permute.xlu0 %579
    %581 = vrot.lane.b32.xlu0 %v518, 64
    %v582 = vpop.permute.xlu0 %581
    %583 = vrot.lane.b32.xlu0 %v520, 64
    %v584 = vpop.permute.xlu0 %583
    %585 = vrot.lane.b32.xlu0 %v522, 64
    %v586 = vpop.permute.xlu0 %585
    %587 = vrot.lane.b32.xlu0 %v524, 64
    %v588 = vpop.permute.xlu0 %587
    %589 = vrot.lane.b32.xlu0 %v526, 64
    %v590 = vpop.permute.xlu0 %589
    %591 = vrot.lane.b32.xlu0 %v528, 64
    %v592 = vpop.permute.xlu0 %591
    %593 = vrot.lane.b32.xlu0 %v530, 64
    %v594 = vpop.permute.xlu0 %593
    %595 = vrot.lane.b32.xlu0 %v532, 64
    %v596 = vpop.permute.xlu0 %595
    %597 = vrot.lane.b32.xlu0 %v534, 64
    %v598 = vpop.permute.xlu0 %597
    %599 = vrot.lane.b32.xlu0 %v536, 64
    %v600 = vpop.permute.xlu0 %599
    %601 = vrot.lane.b32.xlu0 %v538, 64
    %v602 = vpop.permute.xlu0 %601
    %603 = vrot.lane.b32.xlu0 %v540, 64
    %v604 = vpop.permute.xlu0 %603
    %605 = vrot.lane.b32.xlu0 %v542, 64
    %v606 = vpop.permute.xlu0 %605
    %607 = vrot.lane.b32.xlu0 %v544, 64
    %v608 = vpop.permute.xlu0 %607
    %609 = vrot.lane.b32.xlu0 %v546, 64
    %v610 = vpop.permute.xlu0 %609
    %611 = vrot.lane.b32.xlu0 %v548, 64
    %v612 = vpop.permute.xlu0 %611
    %613 = vrot.lane.b32.xlu0 %v550, 64
    %v614 = vpop.permute.xlu0 %613
    %615 = vrot.lane.b32.xlu0 %v552, 64
    %v616 = vpop.permute.xlu0 %615
    %617 = vrot.lane.b32.xlu0 %v554, 64
    %v618 = vpop.permute.xlu0 %617
    %619 = vrot.lane.b32.xlu0 %v556, 64
    %v620 = vpop.permute.xlu0 %619
    %vm653 = vcmask 1044480
    %v654 = vrot.slane %v265, 3
    %v655 = vrot.slane %v266, 3
    %v656 = vsel %vm653, %v654, %v655
    %v657 = vrot.slane %v267, 3
    %v658 = vsel %vm653, %v655, %v657
    %v659 = vrot.slane %v268, 3
    %v660 = vsel %vm653, %v657, %v659
    %v661 = vrot.slane %v269, 3
    %v662 = vsel %vm653, %v659, %v661
    %v663 = vrot.slane %v270, 3
    %v664 = vsel %vm653, %v661, %v663
    %v665 = vrot.slane %v271, 3
    %v666 = vsel %vm653, %v663, %v665
    %v667 = vrot.slane %v272, 3
    %v668 = vsel %vm653, %v665, %v667
    %v669 = vrot.slane %v273, 3
    %v670 = vsel %vm653, %v667, %v669
    %v671 = vrot.slane %v274, 3
    %v672 = vsel %vm653, %v669, %v671
    %v673 = vrot.slane %v275, 3
    %v674 = vsel %vm653, %v671, %v673
    %v675 = vrot.slane %v276, 3
    %v676 = vsel %vm653, %v673, %v675
    %v677 = vrot.slane %v277, 3
    %v678 = vsel %vm653, %v675, %v677
    %v679 = vrot.slane %v278, 3
    %v680 = vsel %vm653, %v677, %v679
    %v681 = vrot.slane %v279, 3
    %v682 = vsel %vm653, %v679, %v681
    %v683 = vrot.slane %v280, 3
    %v684 = vsel %vm653, %v681, %v683
    %v685 = vrot.slane %v281, 3
    %v686 = vsel %vm653, %v683, %v685
    %v687 = vrot.slane %v282, 3
    %v688 = vsel %vm653, %v685, %v687
    %v689 = vrot.slane %v283, 3
    %v690 = vsel %vm653, %v687, %v689
    %v691 = vrot.slane %v284, 3
    %v692 = vsel %vm653, %v689, %v691
    %v693 = vrot.slane %v285, 3
    %v694 = vsel %vm653, %v691, %v693
    %v695 = vrot.slane %v286, 3
    %v696 = vsel %vm653, %v693, %v695
    %v697 = vrot.slane %v287, 3
    %v698 = vsel %vm653, %v695, %v697
    %v699 = vrot.slane %v288, 3
    %v700 = vsel %vm653, %v697, %v699
    %v701 = vrot.slane %v289, 3
    %v702 = vsel %vm653, %v699, %v701
    %v703 = vrot.slane %v290, 3
    %v704 = vsel %vm653, %v701, %v703
    %v705 = vrot.slane %v291, 3
    %v706 = vsel %vm653, %v703, %v705
    %v707 = vrot.slane %v292, 3
    %v708 = vsel %vm653, %v705, %v707
    %v709 = vrot.slane %v293, 3
    %v710 = vsel %vm653, %v707, %v709
    %v711 = vrot.slane %v294, 3
    %v712 = vsel %vm653, %v709, %v711
    %v713 = vrot.slane %v295, 3
    %v714 = vsel %vm653, %v711, %v713
    %v715 = vrot.slane %v296, 3
    %v716 = vsel %vm653, %v713, %v715
    %v717 = vrot.slane 0.0, 3
    %v718 = vsel %vm653, %v715, %v717
    %719 = vrot.lane.b32.xlu0 %v656, 96
    %v720 = vpop.permute.xlu0 %719
    %721 = vrot.lane.b32.xlu0 %v658, 96
    %v722 = vpop.permute.xlu0 %721
    %723 = vrot.lane.b32.xlu0 %v660, 96
    %v724 = vpop.permute.xlu0 %723
    %725 = vrot.lane.b32.xlu0 %v662, 96
    %v726 = vpop.permute.xlu0 %725
    %727 = vrot.lane.b32.xlu0 %v664, 96
    %v728 = vpop.permute.xlu0 %727
    %729 = vrot.lane.b32.xlu0 %v666, 96
    %v730 = vpop.permute.xlu0 %729
    %731 = vrot.lane.b32.xlu0 %v668, 96
    %v732 = vpop.permute.xlu0 %731
    %733 = vrot.lane.b32.xlu0 %v670, 96
    %v734 = vpop.permute.xlu0 %733
    %735 = vrot.lane.b32.xlu0 %v672, 96
    %v736 = vpop.permute.xlu0 %735
    %737 = vrot.lane.b32.xlu0 %v674, 96
    %v738 = vpop.permute.xlu0 %737
    %739 = vrot.lane.b32.xlu0 %v676, 96
    %v740 = vpop.permute.xlu0 %739
    %741 = vrot.lane.b32.xlu0 %v678, 96
    %v742 = vpop.permute.xlu0 %741
    %743 = vrot.lane.b32.xlu0 %v680, 96
    %v744 = vpop.permute.xlu0 %743
    %745 = vrot.lane.b32.xlu0 %v682, 96
    %v746 = vpop.permute.xlu0 %745
    %747 = vrot.lane.b32.xlu0 %v684, 96
    %v748 = vpop.permute.xlu0 %747
    %749 = vrot.lane.b32.xlu0 %v686, 96
    %v750 = vpop.permute.xlu0 %749
    %751 = vrot.lane.b32.xlu0 %v688, 96
    %v752 = vpop.permute.xlu0 %751
    %753 = vrot.lane.b32.xlu0 %v690, 96
    %v754 = vpop.permute.xlu0 %753
    %755 = vrot.lane.b32.xlu0 %v692, 96
    %v756 = vpop.permute.xlu0 %755
    %757 = vrot.lane.b32.xlu0 %v694, 96
    %v758 = vpop.permute.xlu0 %757
    %759 = vrot.lane.b32.xlu0 %v696, 96
    %v760 = vpop.permute.xlu0 %759
    %761 = vrot.lane.b32.xlu0 %v698, 96
    %v762 = vpop.permute.xlu0 %761
    %763 = vrot.lane.b32.xlu0 %v700, 96
    %v764 = vpop.permute.xlu0 %763
    %765 = vrot.lane.b32.xlu0 %v702, 96
    %v766 = vpop.permute.xlu0 %765
    %767 = vrot.lane.b32.xlu0 %v704, 96
    %v768 = vpop.permute.xlu0 %767
    %769 = vrot.lane.b32.xlu0 %v706, 96
    %v770 = vpop.permute.xlu0 %769
    %771 = vrot.lane.b32.xlu0 %v708, 96
    %v772 = vpop.permute.xlu0 %771
    %773 = vrot.lane.b32.xlu0 %v710, 96
    %v774 = vpop.permute.xlu0 %773
    %775 = vrot.lane.b32.xlu0 %v712, 96
    %v776 = vpop.permute.xlu0 %775
    %777 = vrot.lane.b32.xlu0 %v714, 96
    %v778 = vpop.permute.xlu0 %777
    %779 = vrot.lane.b32.xlu0 %v716, 96
    %v780 = vpop.permute.xlu0 %779
    %781 = vrot.lane.b32.xlu0 %v718, 96
    %v782 = vpop.permute.xlu0 %781
    %vm815 = vcmask 1043456
    %v816 = vrot.slane %v265, 4
    %v817 = vrot.slane %v266, 4
    %v818 = vsel %vm815, %v816, %v817
    %v819 = vrot.slane %v267, 4
    %v820 = vsel %vm815, %v817, %v819
    %v821 = vrot.slane %v268, 4
    %v822 = vsel %vm815, %v819, %v821
    %v823 = vrot.slane %v269, 4
    %v824 = vsel %vm815, %v821, %v823
    %v825 = vrot.slane %v270, 4
    %v826 = vsel %vm815, %v823, %v825
    %v827 = vrot.slane %v271, 4
    %v828 = vsel %vm815, %v825, %v827
    %v829 = vrot.slane %v272, 4
    %v830 = vsel %vm815, %v827, %v829
    %v831 = vrot.slane %v273, 4
    %v832 = vsel %vm815, %v829, %v831
    %v833 = vrot.slane %v274, 4
    %v834 = vsel %vm815, %v831, %v833
    %v835 = vrot.slane %v275, 4
    %v836 = vsel %vm815, %v833, %v835
    %v837 = vrot.slane %v276, 4
    %v838 = vsel %vm815, %v835, %v837
    %v839 = vrot.slane %v277, 4
    %v840 = vsel %vm815, %v837, %v839
    %v841 = vrot.slane %v278, 4
    %v842 = vsel %vm815, %v839, %v841
    %v843 = vrot.slane %v279, 4
    %v844 = vsel %vm815, %v841, %v843
    %v845 = vrot.slane %v280, 4
    %v846 = vsel %vm815, %v843, %v845
    %v847 = vrot.slane %v281, 4
    %v848 = vsel %vm815, %v845, %v847
    %v849 = vrot.slane %v282, 4
    %v850 = vsel %vm815, %v847, %v849
    %v851 = vrot.slane %v283, 4
    %v852 = vsel %vm815, %v849, %v851
    %v853 = vrot.slane %v284, 4
    %v854 = vsel %vm815, %v851, %v853
    %v855 = vrot.slane %v285, 4
    %v856 = vsel %vm815, %v853, %v855
    %v857 = vrot.slane %v286, 4
    %v858 = vsel %vm815, %v855, %v857
    %v859 = vrot.slane %v287, 4
    %v860 = vsel %vm815, %v857, %v859
    %v861 = vrot.slane %v288, 4
    %v862 = vsel %vm815, %v859, %v861
    %v863 = vrot.slane %v289, 4
    %v864 = vsel %vm815, %v861, %v863
    %v865 = vrot.slane %v290, 4
    %v866 = vsel %vm815, %v863, %v865
    %v867 = vrot.slane %v291, 4
    %v868 = vsel %vm815, %v865, %v867
    %v869 = vrot.slane %v292, 4
    %v870 = vsel %vm815, %v867, %v869
    %v871 = vrot.slane %v293, 4
    %v872 = vsel %vm815, %v869, %v871
    %v873 = vrot.slane %v294, 4
    %v874 = vsel %vm815, %v871, %v873
    %v875 = vrot.slane %v295, 4
    %v876 = vsel %vm815, %v873, %v875
    %v877 = vrot.slane %v296, 4
    %v878 = vsel %vm815, %v875, %v877
    %v879 = vrot.slane 0.0, 4
    %v880 = vsel %vm815, %v877, %v879
    %vm881 = vcmask 261120
    %v882 = vsel %vm881, %v265, %v397
    %v883 = vsel %vm881, %v266, %v399
    %v884 = vsel %vm881, %v267, %v401
    %v885 = vsel %vm881, %v268, %v403
    %v886 = vsel %vm881, %v269, %v405
    %v887 = vsel %vm881, %v270, %v407
    %v888 = vsel %vm881, %v271, %v409
    %v889 = vsel %vm881, %v272, %v411
    %v890 = vsel %vm881, %v273, %v413
    %v891 = vsel %vm881, %v274, %v415
    %v892 = vsel %vm881, %v275, %v417
    %v893 = vsel %vm881, %v276, %v419
    %v894 = vsel %vm881, %v277, %v421
    %v895 = vsel %vm881, %v278, %v423
    %v896 = vsel %vm881, %v279, %v425
    %v897 = vsel %vm881, %v280, %v427
    %v898 = vsel %vm881, %v281, %v429
    %v899 = vsel %vm881, %v282, %v431
    %v900 = vsel %vm881, %v283, %v433
    %v901 = vsel %vm881, %v284, %v435
    %v902 = vsel %vm881, %v285, %v437
    %v903 = vsel %vm881, %v286, %v439
    %v904 = vsel %vm881, %v287, %v441
    %v905 = vsel %vm881, %v288, %v443
    %v906 = vsel %vm881, %v289, %v445
    %v907 = vsel %vm881, %v290, %v447
    %v908 = vsel %vm881, %v291, %v449
    %v909 = vsel %vm881, %v292, %v451
    %v910 = vsel %vm881, %v293, %v453
    %v911 = vsel %vm881, %v294, %v455
    %v912 = vsel %vm881, %v295, %v457
    %v913 = vsel %vm881, %v296, %v459
    %vm914 = vcmask 523264
    %v915 = vsel %vm914, %v882, %v558
    %v916 = vsel %vm914, %v883, %v560
    %v917 = vsel %vm914, %v884, %v562
    %v918 = vsel %vm914, %v885, %v564
    %v919 = vsel %vm914, %v886, %v566
    %v920 = vsel %vm914, %v887, %v568
    %v921 = vsel %vm914, %v888, %v570
    %v922 = vsel %vm914, %v889, %v572
    %v923 = vsel %vm914, %v890, %v574
    %v924 = vsel %vm914, %v891, %v576
    %v925 = vsel %vm914, %v892, %v578
    %v926 = vsel %vm914, %v893, %v580
    %v927 = vsel %vm914, %v894, %v582
    %v928 = vsel %vm914, %v895, %v584
    %v929 = vsel %vm914, %v896, %v586
    %v930 = vsel %vm914, %v897, %v588
    %v931 = vsel %vm914, %v898, %v590
    %v932 = vsel %vm914, %v899, %v592
    %v933 = vsel %vm914, %v900, %v594
    %v934 = vsel %vm914, %v901, %v596
    %v935 = vsel %vm914, %v902, %v598
    %v936 = vsel %vm914, %v903, %v600
    %v937 = vsel %vm914, %v904, %v602
    %v938 = vsel %vm914, %v905, %v604
    %v939 = vsel %vm914, %v906, %v606
    %v940 = vsel %vm914, %v907, %v608
    %v941 = vsel %vm914, %v908, %v610
    %v942 = vsel %vm914, %v909, %v612
    %v943 = vsel %vm914, %v910, %v614
    %v944 = vsel %vm914, %v911, %v616
    %v945 = vsel %vm914, %v912, %v618
    %v946 = vsel %vm914, %v913, %v620
    %vm947 = vcmask 785408
    %v948 = vsel %vm947, %v915, %v720
    %v949 = vsel %vm947, %v916, %v722
    %v950 = vsel %vm947, %v917, %v724
    %v951 = vsel %vm947, %v918, %v726
    %v952 = vsel %vm947, %v919, %v728
    %v953 = vsel %vm947, %v920, %v730
    %v954 = vsel %vm947, %v921, %v732
    %v955 = vsel %vm947, %v922, %v734
    %v956 = vsel %vm947, %v923, %v736
    %v957 = vsel %vm947, %v924, %v738
    %v958 = vsel %vm947, %v925, %v740
    %v959 = vsel %vm947, %v926, %v742
    %v960 = vsel %vm947, %v927, %v744
    %v961 = vsel %vm947, %v928, %v746
    %v962 = vsel %vm947, %v929, %v748
    %v963 = vsel %vm947, %v930, %v750
    %v964 = vsel %vm947, %v931, %v752
    %v965 = vsel %vm947, %v932, %v754
    %v966 = vsel %vm947, %v933, %v756
    %v967 = vsel %vm947, %v934, %v758
    %v968 = vsel %vm947, %v935, %v760
    %v969 = vsel %vm947, %v936, %v762
    %v970 = vsel %vm947, %v937, %v764
    %v971 = vsel %vm947, %v938, %v766
    %v972 = vsel %vm947, %v939, %v768
    %v973 = vsel %vm947, %v940, %v770
    %v974 = vsel %vm947, %v941, %v772
    %v975 = vsel %vm947, %v942, %v774
    %v976 = vsel %vm947, %v943, %v776
    %v977 = vsel %vm947, %v944, %v778
    %v978 = vsel %vm947, %v945, %v780
    %v979 = vsel %vm947, %v946, %v782
    %v980 = vld [vmem:[%s3] sm:$0xff]
    %v981 = vld [vmem:[%s3 + $0x8] sm:$0xff]
    %v982 = vld [vmem:[%s3 + $0x10] sm:$0xff]
    %v983 = vld [vmem:[%s3 + $0x18] sm:$0xff]
    %v984 = vld [vmem:[%s3 + $0x20] sm:$0xff]
    %v985 = vld [vmem:[%s3 + $0x28] sm:$0xff]
    %v986 = vld [vmem:[%s3 + $0x30] sm:$0xff]
    %v987 = vld [vmem:[%s3 + $0x38] sm:$0xff]
    %v988 = vld [vmem:[%s3 + $0x40] sm:$0xff]
    %v989 = vld [vmem:[%s3 + $0x48] sm:$0xff]
    %v990 = vld [vmem:[%s3 + $0x50] sm:$0xff]
    %v991 = vld [vmem:[%s3 + $0x58] sm:$0xff]
    %v992 = vld [vmem:[%s3 + $0x60] sm:$0xff]
    %v993 = vld [vmem:[%s3 + $0x68] sm:$0xff]
    %v994 = vld [vmem:[%s3 + $0x70] sm:$0xff]
    %v995 = vld [vmem:[%s3 + $0x78] sm:$0xff]
    %v996 = vld [vmem:[%s3 + $0x80] sm:$0xff]
    %v997 = vld [vmem:[%s3 + $0x88] sm:$0xff]
    %v998 = vld [vmem:[%s3 + $0x90] sm:$0xff]
    %v999 = vld [vmem:[%s3 + $0x98] sm:$0xff]
    %v1000 = vld [vmem:[%s4] sm:$0x1]
    %v1002 = vperm.slane %v1000, 0
    %v1004 = vsel %vm881, %v818, 0
    %v1006 = vsel %vm881, %v820, 0
    %v1008 = vsel %vm881, %v822, 0
    %v1010 = vsel %vm881, %v824, 0
    %v1012 = vsel %vm881, %v826, 0
    %v1014 = vsel %vm881, %v828, 0
    %v1016 = vsel %vm881, %v830, 0
    %v1018 = vsel %vm881, %v832, 0
    %v1020 = vsel %vm881, %v834, 0
    %v1022 = vsel %vm881, %v836, 0
    %v1024 = vsel %vm881, %v838, 0
    %v1026 = vsel %vm881, %v840, 0
    %v1028 = vsel %vm881, %v842, 0
    %v1030 = vsel %vm881, %v844, 0
    %v1032 = vsel %vm881, %v846, 0
    %v1034 = vsel %vm881, %v848, 0
    %v1036 = vsel %vm881, %v850, 0
    %v1038 = vsel %vm881, %v852, 0
    %v1040 = vsel %vm881, %v854, 0
    %v1042 = vsel %vm881, %v856, 0
    %v1044 = vsel %vm881, %v858, 0
    %v1046 = vsel %vm881, %v860, 0
    %v1048 = vsel %vm881, %v862, 0
    %v1050 = vsel %vm881, %v864, 0
    %v1052 = vsel %vm881, %v866, 0
    %v1054 = vsel %vm881, %v868, 0
    %v1056 = vsel %vm881, %v870, 0
    %v1058 = vsel %vm881, %v872, 0
    %v1060 = vsel %vm881, %v874, 0
    %v1062 = vsel %vm881, %v876, 0
    %v1064 = vsel %vm881, %v878, 0
    %v1066 = vsel %vm881, %v880, 0
    %1068 = vmatpush.msra.mxu0 %v995
    %1069 = vmatpush.msra.mxu0 %v994
    %1070 = vmatpush.msra.mxu0 %v993
    %1071 = vmatpush.msra.mxu0 %v992
    %1072 = vmatpush.msra.mxu0 %v991
    %1073 = vmatpush.msra.mxu0 %v990
    %1074 = vmatpush.msra.mxu0 %v989
    %1075 = vmatpush.msra.mxu0 %v988
    %1076 = vmatpush.msra.mxu0 %v987
    %1077 = vmatpush.msra.mxu0 %v986
    %1078 = vmatpush.msra.mxu0 %v985
    %1079 = vmatpush.msra.mxu0 %v984
    %1080 = vmatpush.msra.mxu0 %v983
    %1081 = vmatpush.msra.mxu0 %v982
    %1082 = vmatpush.msra.mxu0 %v981
    %1083 = vmatpush.msra.mxu0 %v980
    %1084 = vmatmul.f32.gmra.mxu0 %v948
    %v1085 = vpop.f32.mrf.mxu0
    %v1086 = vadd.f32 %v1002, %v1085
    %1087 = vmatmul.f32.gmra.mxu0 %v949
    %v1088 = vpop.f32.mrf.mxu0
    %v1089 = vadd.f32 %v1002, %v1088
    %1090 = vmatmul.f32.gmra.mxu0 %v950
    %v1091 = vpop.f32.mrf.mxu0
    %v1092 = vadd.f32 %v1002, %v1091
    %1093 = vmatmul.f32.gmra.mxu0 %v951
    %v1094 = vpop.f32.mrf.mxu0
    %v1095 = vadd.f32 %v1002, %v1094
    %1096 = vmatmul.f32.gmra.mxu0 %v952
    %v1097 = vpop.f32.mrf.mxu0
    %v1098 = vadd.f32 %v1002, %v1097
    %1099 = vmatmul.f32.gmra.mxu0 %v953
    %v1100 = vpop.f32.mrf.mxu0
    %v1101 = vadd.f32 %v1002, %v1100
    %1102 = vmatmul.f32.gmra.mxu0 %v954
    %v1103 = vpop.f32.mrf.mxu0
    %v1104 = vadd.f32 %v1002, %v1103
    %1105 = vmatmul.f32.gmra.mxu0 %v955
    %v1106 = vpop.f32.mrf.mxu0
    %v1107 = vadd.f32 %v1002, %v1106
    %1108 = vmatmul.f32.gmra.mxu0 %v956
    %v1109 = vpop.f32.mrf.mxu0
    %v1110 = vadd.f32 %v1002, %v1109
    %1111 = vmatmul.f32.gmra.mxu0 %v957
    %v1112 = vpop.f32.mrf.mxu0
    %v1113 = vadd.f32 %v1002, %v1112
    %1114 = vmatmul.f32.gmra.mxu0 %v958
    %v1115 = vpop.f32.mrf.mxu0
    %v1116 = vadd.f32 %v1002, %v1115
    %1117 = vmatmul.f32.gmra.mxu0 %v959
    %v1118 = vpop.f32.mrf.mxu0
    %v1119 = vadd.f32 %v1002, %v1118
    %1120 = vmatmul.f32.gmra.mxu0 %v960
    %v1121 = vpop.f32.mrf.mxu0
    %v1122 = vadd.f32 %v1002, %v1121
    %1123 = vmatmul.f32.gmra.mxu0 %v961
    %v1124 = vpop.f32.mrf.mxu0
    %v1125 = vadd.f32 %v1002, %v1124
    %1126 = vmatmul.f32.gmra.mxu0 %v962
    %v1127 = vpop.f32.mrf.mxu0
    %v1128 = vadd.f32 %v1002, %v1127
    %1129 = vmatmul.f32.gmra.mxu0 %v963
    %v1130 = vpop.f32.mrf.mxu0
    %v1131 = vadd.f32 %v1002, %v1130
    %1132 = vmatmul.f32.gmra.mxu0 %v964
    %v1133 = vpop.f32.mrf.mxu0
    %v1134 = vadd.f32 %v1002, %v1133
    %1135 = vmatmul.f32.gmra.mxu0 %v965
    %v1136 = vpop.f32.mrf.mxu0
    %v1137 = vadd.f32 %v1002, %v1136
    %1138 = vmatmul.f32.gmra.mxu0 %v966
    %v1139 = vpop.f32.mrf.mxu0
    %v1140 = vadd.f32 %v1002, %v1139
    %1141 = vmatmul.f32.gmra.mxu0 %v967
    %v1142 = vpop.f32.mrf.mxu0
    %v1143 = vadd.f32 %v1002, %v1142
    %1144 = vmatmul.f32.gmra.mxu0 %v968
    %v1145 = vpop.f32.mrf.mxu0
    %v1146 = vadd.f32 %v1002, %v1145
    %1147 = vmatmul.f32.gmra.mxu0 %v969
    %v1148 = vpop.f32.mrf.mxu0
    %v1149 = vadd.f32 %v1002, %v1148
    %1150 = vmatmul.f32.gmra.mxu0 %v970
    %v1151 = vpop.f32.mrf.mxu0
    %v1152 = vadd.f32 %v1002, %v1151
    %1153 = vmatmul.f32.gmra.mxu0 %v971
    %v1154 = vpop.f32.mrf.mxu0
    %v1155 = vadd.f32 %v1002, %v1154
    %1156 = vmatmul.f32.gmra.mxu0 %v972
    %v1157 = vpop.f32.mrf.mxu0
    %v1158 = vadd.f32 %v1002, %v1157
    %1159 = vmatmul.f32.gmra.mxu0 %v973
    %v1160 = vpop.f32.mrf.mxu0
    %v1161 = vadd.f32 %v1002, %v1160
    %1162 = vmatmul.f32.gmra.mxu0 %v974
    %v1163 = vpop.f32.mrf.mxu0
    %v1164 = vadd.f32 %v1002, %v1163
    %1165 = vmatmul.f32.gmra.mxu0 %v975
    %v1166 = vpop.f32.mrf.mxu0
    %v1167 = vadd.f32 %v1002, %v1166
    %1168 = vmatmul.f32.gmra.mxu0 %v976
    %v1169 = vpop.f32.mrf.mxu0
    %v1170 = vadd.f32 %v1002, %v1169
    %1171 = vmatmul.f32.gmra.mxu0 %v977
    %v1172 = vpop.f32.mrf.mxu0
    %v1173 = vadd.f32 %v1002, %v1172
    %1174 = vmatmul.f32.gmra.mxu0 %v978
    %v1175 = vpop.f32.mrf.mxu0
    %v1176 = vadd.f32 %v1002, %v1175
    %1177 = vmatmul.f32.gmra.mxu0 %v979
    %v1178 = vpop.f32.mrf.mxu0
    %v1179 = vadd.f32 %v1002, %v1178
    %1180 = vdwg.mxu0
    %1181 = vmatpush.msra.mxu0 0.0
    %1182 = vmatpush.msra.mxu0 0.0
    %1183 = vmatpush.msra.mxu0 0.0
    %1184 = vmatpush.msra.mxu0 0.0
    %1185 = vmatpush.msra.mxu0 0.0
    %1186 = vmatpush.msra.mxu0 0.0
    %1187 = vmatpush.msra.mxu0 0.0
    %1188 = vmatpush.msra.mxu0 0.0
    %1189 = vmatpush.msra.mxu0 0.0
    %1190 = vmatpush.msra.mxu0 0.0
    %1191 = vmatpush.msra.mxu0 0.0
    %1192 = vmatpush.msra.mxu0 0.0
    %1193 = vmatpush.msra.mxu0 %v999
    %1194 = vmatpush.msra.mxu0 %v998
    %1195 = vmatpush.msra.mxu0 %v997
    %1196 = vmatpush.msra.mxu0 %v996
    %1197 = vmatmul.f32.gmra.mxu0 %v1004
    %v1198 = vpop.f32.mrf.mxu0
    %v1199 = vadd.f32 %v1086, %v1198
    %1200 = vmatmul.f32.gmra.mxu0 %v1006
    %v1201 = vpop.f32.mrf.mxu0
    %v1202 = vadd.f32 %v1089, %v1201
    %1203 = vmatmul.f32.gmra.mxu0 %v1008
    %v1204 = vpop.f32.mrf.mxu0
    %v1205 = vadd.f32 %v1092, %v1204
    %1206 = vmatmul.f32.gmra.mxu0 %v1010
    %v1207 = vpop.f32.mrf.mxu0
    %v1208 = vadd.f32 %v1095, %v1207
    %1209 = vmatmul.f32.gmra.mxu0 %v1012
    %v1210 = vpop.f32.mrf.mxu0
    %v1211 = vadd.f32 %v1098, %v1210
    %1212 = vmatmul.f32.gmra.mxu0 %v1014
    %v1213 = vpop.f32.mrf.mxu0
    %v1214 = vadd.f32 %v1101, %v1213
    %1215 = vmatmul.f32.gmra.mxu0 %v1016
    %v1216 = vpop.f32.mrf.mxu0
    %v1217 = vadd.f32 %v1104, %v1216
    %1218 = vmatmul.f32.gmra.mxu0 %v1018
    %v1219 = vpop.f32.mrf.mxu0
    %v1220 = vadd.f32 %v1107, %v1219
    %1221 = vmatmul.f32.gmra.mxu0 %v1020
    %v1222 = vpop.f32.mrf.mxu0
    %v1223 = vadd.f32 %v1110, %v1222
    %1224 = vmatmul.f32.gmra.mxu0 %v1022
    %v1225 = vpop.f32.mrf.mxu0
    %v1226 = vadd.f32 %v1113, %v1225
    %1227 = vmatmul.f32.gmra.mxu0 %v1024
    %v1228 = vpop.f32.mrf.mxu0
    %v1229 = vadd.f32 %v1116, %v1228
    %1230 = vmatmul.f32.gmra.mxu0 %v1026
    %v1231 = vpop.f32.mrf.mxu0
    %v1232 = vadd.f32 %v1119, %v1231
    %1233 = vmatmul.f32.gmra.mxu0 %v1028
    %v1234 = vpop.f32.mrf.mxu0
    %v1235 = vadd.f32 %v1122, %v1234
    %1236 = vmatmul.f32.gmra.mxu0 %v1030
    %v1237 = vpop.f32.mrf.mxu0
    %v1238 = vadd.f32 %v1125, %v1237
    %1239 = vmatmul.f32.gmra.mxu0 %v1032
    %v1240 = vpop.f32.mrf.mxu0
    %v1241 = vadd.f32 %v1128, %v1240
    %1242 = vmatmul.f32.gmra.mxu0 %v1034
    %v1243 = vpop.f32.mrf.mxu0
    %v1244 = vadd.f32 %v1131, %v1243
    %1245 = vmatmul.f32.gmra.mxu0 %v1036
    %v1246 = vpop.f32.mrf.mxu0
    %v1247 = vadd.f32 %v1134, %v1246
    %1248 = vmatmul.f32.gmra.mxu0 %v1038
    %v1249 = vpop.f32.mrf.mxu0
    %v1250 = vadd.f32 %v1137, %v1249
    %1251 = vmatmul.f32.gmra.mxu0 %v1040
    %v1252 = vpop.f32.mrf.mxu0
    %v1253 = vadd.f32 %v1140, %v1252
    %1254 = vmatmul.f32.gmra.mxu0 %v1042
    %v1255 = vpop.f32.mrf.mxu0
    %v1256 = vadd.f32 %v1143, %v1255
    %1257 = vmatmul.f32.gmra.mxu0 %v1044
    %v1258 = vpop.f32.mrf.mxu0
    %v1259 = vadd.f32 %v1146, %v1258
    %1260 = vmatmul.f32.gmra.mxu0 %v1046
    %v1261 = vpop.f32.mrf.mxu0
    %v1262 = vadd.f32 %v1149, %v1261
    %1263 = vmatmul.f32.gmra.mxu0 %v1048
    %v1264 = vpop.f32.mrf.mxu0
    %v1265 = vadd.f32 %v1152, %v1264
    %1266 = vmatmul.f32.gmra.mxu0 %v1050
    %v1267 = vpop.f32.mrf.mxu0
    %v1268 = vadd.f32 %v1155, %v1267
    %1269 = vmatmul.f32.gmra.mxu0 %v1052
    %v1270 = vpop.f32.mrf.mxu0
    %v1271 = vadd.f32 %v1158, %v1270
    %1272 = vmatmul.f32.gmra.mxu0 %v1054
    %v1273 = vpop.f32.mrf.mxu0
    %v1274 = vadd.f32 %v1161, %v1273
    %1275 = vmatmul.f32.gmra.mxu0 %v1056
    %v1276 = vpop.f32.mrf.mxu0
    %v1277 = vadd.f32 %v1164, %v1276
    %1278 = vmatmul.f32.gmra.mxu0 %v1058
    %v1279 = vpop.f32.mrf.mxu0
    %v1280 = vadd.f32 %v1167, %v1279
    %1281 = vmatmul.f32.gmra.mxu0 %v1060
    %v1282 = vpop.f32.mrf.mxu0
    %v1283 = vadd.f32 %v1170, %v1282
    %1284 = vmatmul.f32.gmra.mxu0 %v1062
    %v1285 = vpop.f32.mrf.mxu0
    %v1286 = vadd.f32 %v1173, %v1285
    %1287 = vmatmul.f32.gmra.mxu0 %v1064
    %v1288 = vpop.f32.mrf.mxu0
    %v1289 = vadd.f32 %v1176, %v1288
    %1290 = vmatmul.f32.gmra.mxu0 %v1066
    %v1291 = vpop.f32.mrf.mxu0
    %v1292 = vadd.f32 %v1179, %v1291
    %1293 = vdwg.mxu0
    %v1294 = vmax.f32 %v1199, 0.0
    %v1295 = vmax.f32 %v1202, 0.0
    %v1296 = vmax.f32 %v1205, 0.0
    %v1297 = vmax.f32 %v1208, 0.0
    %v1298 = vmax.f32 %v1211, 0.0
    %v1299 = vmax.f32 %v1214, 0.0
    %v1300 = vmax.f32 %v1217, 0.0
    %v1301 = vmax.f32 %v1220, 0.0
    %v1302 = vmax.f32 %v1223, 0.0
    %v1303 = vmax.f32 %v1226, 0.0
    %v1304 = vmax.f32 %v1229, 0.0
    %v1305 = vmax.f32 %v1232, 0.0
    %v1306 = vmax.f32 %v1235, 0.0
    %v1307 = vmax.f32 %v1238, 0.0
    %v1308 = vmax.f32 %v1241, 0.0
    %v1309 = vmax.f32 %v1244, 0.0
    %v1310 = vmax.f32 %v1247, 0.0
    %v1311 = vmax.f32 %v1250, 0.0
    %v1312 = vmax.f32 %v1253, 0.0
    %v1313 = vmax.f32 %v1256, 0.0
    %v1314 = vmax.f32 %v1259, 0.0
    %v1315 = vmax.f32 %v1262, 0.0
    %v1316 = vmax.f32 %v1265, 0.0
    %v1317 = vmax.f32 %v1268, 0.0
    %v1318 = vmax.f32 %v1271, 0.0
    %v1319 = vmax.f32 %v1274, 0.0
    %v1320 = vmax.f32 %v1277, 0.0
    %v1321 = vmax.f32 %v1280, 0.0
    %v1322 = vmax.f32 %v1283, 0.0
    %v1323 = vmax.f32 %v1286, 0.0
    %v1324 = vmax.f32 %v1289, 0.0
    %v1325 = vmax.f32 %v1292, 0.0
    %v1326 = vsel %vm914, %v1294, 0.0
    %v1327 = vsel %vm914, %v1295, 0.0
    %v1328 = vadd.f32 %v1326, %v1327
    %v1329 = vsel %vm914, %v1296, 0.0
    %v1330 = vadd.f32 %v1328, %v1329
    %vm1331 = vcmask 517120
    %v1332 = vsel %vm1331, %v1297, 0.0
    %v1333 = vadd.f32 %v1330, %v1332
    %v1334 = vrot.slane %v1333, 4
    %v1335 = vadd.f32 %v1333, %v1334
    %v1336 = vrot.slane %v1335, 2
    %v1337 = vadd.f32 %v1335, %v1336
    %v1338 = vrot.slane %v1337, 1
    %v1339 = vadd.f32 %v1337, %v1338
    %v1340 = vsel %vm914, %v1298, 0.0
    %v1341 = vsel %vm914, %v1299, 0.0
    %v1342 = vadd.f32 %v1340, %v1341
    %v1343 = vsel %vm914, %v1300, 0.0
    %v1344 = vadd.f32 %v1342, %v1343
    %v1345 = vsel %vm1331, %v1301, 0.0
    %v1346 = vadd.f32 %v1344, %v1345
    %v1347 = vrot.slane %v1346, 4
    %v1348 = vadd.f32 %v1346, %v1347
    %v1349 = vrot.slane %v1348, 2
    %v1350 = vadd.f32 %v1348, %v1349
    %v1351 = vrot.slane %v1350, 1
    %v1352 = vadd.f32 %v1350, %v1351
    %v1353 = vsel %vm914, %v1302, 0.0
    %v1354 = vsel %vm914, %v1303, 0.0
    %v1355 = vadd.f32 %v1353, %v1354
    %v1356 = vsel %vm914, %v1304, 0.0
    %v1357 = vadd.f32 %v1355, %v1356
    %v1358 = vsel %vm1331, %v1305, 0.0
    %v1359 = vadd.f32 %v1357, %v1358
    %v1360 = vrot.slane %v1359, 4
    %v1361 = vadd.f32 %v1359, %v1360
    %v1362 = vrot.slane %v1361, 2
    %v1363 = vadd.f32 %v1361, %v1362
    %v1364 = vrot.slane %v1363, 1
    %v1365 = vadd.f32 %v1363, %v1364
    %v1366 = vsel %vm914, %v1306, 0.0
    %v1367 = vsel %vm914, %v1307, 0.0
    %v1368 = vadd.f32 %v1366, %v1367
    %v1369 = vsel %vm914, %v1308, 0.0
    %v1370 = vadd.f32 %v1368, %v1369
    %v1371 = vsel %vm1331, %v1309, 0.0
    %v1372 = vadd.f32 %v1370, %v1371
    %v1373 = vrot.slane %v1372, 4
    %v1374 = vadd.f32 %v1372, %v1373
    %v1375 = vrot.slane %v1374, 2
    %v1376 = vadd.f32 %v1374, %v1375
    %v1377 = vrot.slane %v1376, 1
    %v1378 = vadd.f32 %v1376, %v1377
    %v1379 = vsel %vm914, %v1310, 0.0
    %v1380 = vsel %vm914, %v1311, 0.0
    %v1381 = vadd.f32 %v1379, %v1380
    %v1382 = vsel %vm914, %v1312, 0.0
    %v1383 = vadd.f32 %v1381, %v1382
    %v1384 = vsel %vm1331, %v1313, 0.0
    %v1385 = vadd.f32 %v1383, %v1384
    %v1386 = vrot.slane %v1385, 4
    %v1387 = vadd.f32 %v1385, %v1386
    %v1388 = vrot.slane %v1387, 2
    %v1389 = vadd.f32 %v1387, %v1388
    %v1390 = vrot.slane %v1389, 1
    %v1391 = vadd.f32 %v1389, %v1390
    %v1392 = vsel %vm914, %v1314, 0.0
    %v1393 = vsel %vm914, %v1315, 0.0
    %v1394 = vadd.f32 %v1392, %v1393
    %v1395 = vsel %vm914, %v1316, 0.0
    %v1396 = vadd.f32 %v1394, %v1395
    %v1397 = vsel %vm1331, %v1317, 0.0
    %v1398 = vadd.f32 %v1396, %v1397
    %v1399 = vrot.slane %v1398, 4
    %v1400 = vadd.f32 %v1398, %v1399
    %v1401 = vrot.slane %v1400, 2
    %v1402 = vadd.f32 %v1400, %v1401
    %v1403 = vrot.slane %v1402, 1
    %v1404 = vadd.f32 %v1402, %v1403
    %v1405 = vsel %vm914, %v1318, 0.0
    %v1406 = vsel %vm914, %v1319, 0.0
    %v1407 = vadd.f32 %v1405, %v1406
    %v1408 = vsel %vm914, %v1320, 0.0
    %v1409 = vadd.f32 %v1407, %v1408
    %v1410 = vsel %vm1331, %v1321, 0.0
    %v1411 = vadd.f32 %v1409, %v1410
    %v1412 = vrot.slane %v1411, 4
    %v1413 = vadd.f32 %v1411, %v1412
    %v1414 = vrot.slane %v1413, 2
    %v1415 = vadd.f32 %v1413, %v1414
    %v1416 = vrot.slane %v1415, 1
    %v1417 = vadd.f32 %v1415, %v1416
    %v1418 = vsel %vm914, %v1322, 0.0
    %v1419 = vsel %vm914, %v1323, 0.0
    %v1420 = vadd.f32 %v1418, %v1419
    %v1421 = vsel %vm914, %v1324, 0.0
    %v1422 = vadd.f32 %v1420, %v1421
    %v1423 = vsel %vm1331, %v1325, 0.0
    %v1424 = vadd.f32 %v1422, %v1423
    %v1425 = vrot.slane %v1424, 4
    %v1426 = vadd.f32 %v1424, %v1425
    %v1427 = vrot.slane %v1426, 2
    %v1428 = vadd.f32 %v1426, %v1427
    %v1429 = vrot.slane %v1428, 1
    %v1430 = vadd.f32 %v1428, %v1429
    %v1431 = vmul.f32 %v1339, 0.03846154
    %v1432 = vmul.f32 %v1352, 0.03846154
    %v1433 = vmul.f32 %v1365, 0.03846154
    %v1434 = vmul.f32 %v1378, 0.03846154
    %v1435 = vmul.f32 %v1391, 0.03846154
    %v1436 = vmul.f32 %v1404, 0.03846154
    %v1437 = vmul.f32 %v1417, 0.03846154
    %v1438 = vmul.f32 %v1430, 0.03846154
    %v1439 = vld [vmem:[%s5] sm:$0xff]
    %v1440 = vld [vmem:[%s5 + $0x8] sm:$0xff]
    %v1441 = vld [vmem:[%s5 + $0x10] sm:$0xff]
    %v1442 = vld [vmem:[%s5 + $0x18] sm:$0xff]
    %v1443 = vld [vmem:[%s5 + $0x20] sm:$0xff]
    %v1444 = vld [vmem:[%s5 + $0x28] sm:$0xff]
    %v1445 = vld [vmem:[%s5 + $0x30] sm:$0xff]
    %v1446 = vld [vmem:[%s5 + $0x38] sm:$0xff]
    %v1447 = vld [vmem:[%s6] sm:$0x1]
    %v1449 = vperm.slane %v1447, 0
    %vm1459 = vcmask 1041409
    %v1460 = vsel %vm1459, %v1432, %v1431
    %vm1461 = vcmask 1042434
    %v1462 = vsel %vm1461, %v1433, %v1460
    %vm1463 = vcmask 1043459
    %v1464 = vsel %vm1463, %v1434, %v1462
    %vm1465 = vcmask 1044484
    %v1466 = vsel %vm1465, %v1435, %v1464
    %vm1467 = vcmask 1045509
    %v1468 = vsel %vm1467, %v1436, %v1466
    %vm1469 = vcmask 1046534
    %v1470 = vsel %vm1469, %v1437, %v1468
    %vm1471 = vcmask 1047559
    %v1472 = vsel %vm1471, %v1438, %v1470
    %v1473 = vsel %vm914, %v1472, 0
    %1475 = vmatpush.msra.mxu0 0.0
    %1476 = vmatpush.msra.mxu0 0.0
    %1477 = vmatpush.msra.mxu0 0.0
    %1478 = vmatpush.msra.mxu0 0.0
    %1479 = vmatpush.msra.mxu0 0.0
    %1480 = vmatpush.msra.mxu0 0.0
    %1481 = vmatpush.msra.mxu0 0.0
    %1482 = vmatpush.msra.mxu0 0.0
    %1483 = vmatpush.msra.mxu0 %v1446
    %1484 = vmatpush.msra.mxu0 %v1445
    %1485 = vmatpush.msra.mxu0 %v1444
    %1486 = vmatpush.msra.mxu0 %v1443
    %1487 = vmatpush.msra.mxu0 %v1442
    %1488 = vmatpush.msra.mxu0 %v1441
    %1489 = vmatpush.msra.mxu0 %v1440
    %1490 = vmatpush.msra.mxu0 %v1439
    %1491 = vmatmul.f32.gmra.mxu0 %v1473
    %v1492 = vpop.f32.mrf.mxu0
    %v1493 = vadd.f32 %v1449, %v1492
    %1494 = vdwg.mxu0
    %v1495 = vmax.f32 %v1493, 0.0
    %v1496 = vld [vmem:[%s7] sm:$0xff]
    %v1497 = vld [vmem:[%s7 + $0x8] sm:$0xff]
    %v1498 = vld [vmem:[%s7 + $0x10] sm:$0xff]
    %v1499 = vld [vmem:[%s7 + $0x18] sm:$0xff]
    %v1500 = vld [vmem:[%s7 + $0x20] sm:$0xff]
    %v1501 = vld [vmem:[%s7 + $0x28] sm:$0xff]
    %v1502 = vld [vmem:[%s7 + $0x30] sm:$0xff]
    %v1503 = vld [vmem:[%s7 + $0x38] sm:$0xff]
    %v1504 = vld [vmem:[%s8] sm:$0x1]
    %v1506 = vperm.slane %v1504, 0
    %v1509 = vsel %vm914, %v1495, 0
    %1511 = vmatpush.msra.mxu0 0.0
    %1512 = vmatpush.msra.mxu0 0.0
    %1513 = vmatpush.msra.mxu0 0.0
    %1514 = vmatpush.msra.mxu0 0.0
    %1515 = vmatpush.msra.mxu0 0.0
    %1516 = vmatpush.msra.mxu0 0.0
    %1517 = vmatpush.msra.mxu0 0.0
    %1518 = vmatpush.msra.mxu0 0.0
    %1519 = vmatpush.msra.mxu0 %v1503
    %1520 = vmatpush.msra.mxu0 %v1502
    %1521 = vmatpush.msra.mxu0 %v1501
    %1522 = vmatpush.msra.mxu0 %v1500
    %1523 = vmatpush.msra.mxu0 %v1499
    %1524 = vmatpush.msra.mxu0 %v1498
    %1525 = vmatpush.msra.mxu0 %v1497
    %1526 = vmatpush.msra.mxu0 %v1496
    %1527 = vmatmul.f32.gmra.mxu0 %v1509
    %v1528 = vpop.f32.mrf.mxu0
    %v1529 = vadd.f32 %v1506, %v1528
    %1530 = vdwg.mxu0
    %v1531 = vxor.u32 %v1529, 2147483648
    %v1532 = vmul.f32 %v1531, 1.442695
    %v1533 = vpow.pop %v1532
    %v1534 = vadd.f32 %v1533, 1.0
    %v1535 = vrcp.pop %v1534
    %v1536 = vmul.f32 %v1534, %v1535
    %v1537 = vsub.f32 1.0, %v1536
    %v1538 = vmul.f32 %v1535, %v1537
    %v1539 = vadd.f32 %v1535, %v1538
    %vm1540 = vweird.f32 %v1534
    %vm1541 = vweird.f32 %v1535
    %vm1542 = vmor %vm1540, %vm1541
    %v1543 = vsel %vm1542, %v1535, %v1539
    %v1544 = vand.u32 2147483647, %v1534
    %vm1545 = vcmp.eq.f32.partialorder %v1544, 8.507059e+37
    %v1546 = vand.u32 %v1534, 2147483648
    %v1547 = vor.u32 1.1754944e-38, %v1546
    %v1548 = vsel %vm1545, %v1547, %v1543
    %v1549 = vmul.f32 1.0, %v1548
    %1550 = vst [vmem:[#allocation2] sm:$0xff] %v1549
    // Predicated region
    $region38: #{tpu_custom_call.1} parent=1 // pred_check
      _
    $region39: #{tpu_custom_call.1} parent=1 // pred_check_branch
      %1552 = sbr.rel (0) target = $region41
    $region40: #{tpu_custom_call.1} parent=1 // pred_region
      %1554 = vsyncadd [#allocation3], 0
      %s1556 = sshll.u32 [#allocation2], 4
      %s1557 = int_to_ptr.vmem [resolvable:$true] %s1556
      %s1558 = sshll.u32 %s9, 4
      %s1559 = int_to_ptr.hbm [resolvable:$true] %s1558
      %1561 = dma.vmem_to_hbm [thread:$0]  %s1557, 128, %s1559, [#allocation3]
    $region41: #{tpu_custom_call.1} parent=1 // pred_fallthru
      _
    // Predicated region
    $region42: #{tpu_custom_call.1} parent=1 // pred_check
      _
    $region43: #{tpu_custom_call.1} parent=1 // pred_check_branch
      %1563 = sbr.rel (0) target = $region45
    $region44: #{tpu_custom_call.1} parent=1 // pred_region
      %1565 = dma.done [#allocation3], 128
    $region45: #{tpu_custom_call.1} parent=1 // pred_fallthru
      _
    %1566 = vsyncpa [#allocation3], 1

</llo_original>
